<compile_context>
chip_gen: v5e
topology: v5e:2x2
jax: 0.10.0
libtpu: 0.0.40
codegen_flags: <defaults>
</compile_context>

<pallas_src>
import functools

import jax
import jax.numpy as jnp
from jax.experimental import pallas as pl
from jax.experimental.pallas import tpu as pltpu

LANE = 128


def _round_up(n, m):
    return (n + m - 1) // m * m


# ----------------------- fused GRU + fc kernel (single call) -----------------
def fused_gru_fc_kernel(x_ref, wih_ref, bih_ref, whh_ref, bhh_ref,
                        wfc_ref, bfc_ref, o_ref, hs_ref, *, seq_len, hidden):
    T, H = seq_len, hidden
    B = o_ref.shape[0]

    # Hoisted input projection for ALL timesteps at once: (T*B, 3H).
    # bf16 x bf16 on the MXU, f32 accumulation; biases added in f32.
    x_proj = (jnp.dot(x_ref[...], wih_ref[...],
                      preferred_element_type=jnp.float32)
              + bih_ref[...])

    whh = whh_ref[...]            # (H, 3H)  bf16, gate order [r, z, n]
    bhh = bhh_ref[...]            # (1, 3H)  f32

    h = jnp.zeros((B, H), jnp.float32)

    # T is a compile-time constant (tiny); unrolled serial recurrence. Only the
    # h @ W_hh matmul sits on the latency-critical chain — the fc contraction
    # is deferred to a single matmul after the loop.
    for t in range(T):
        gi = x_proj[t * B:(t + 1) * B, :]                                 # (B,3H)
        gh = jnp.dot(h.astype(jnp.bfloat16), whh,
                     preferred_element_type=jnp.float32) + bhh            # (B,3H)
        rz = jax.nn.sigmoid(gi[:, :2 * H] + gh[:, :2 * H])                # (B,2H)
        r = rz[:, :H]
        z = rz[:, H:]
        n = jnp.tanh(gi[:, 2 * H:] + r * gh[:, 2 * H:])
        h = (1.0 - z) * n + z * h
        hs_ref[:, t * H:(t + 1) * H] = h        # park h_t in VMEM scratch

    # One large (B, T*H) @ (T*H, 128) fc matmul; single lane-dense 128-wide store.
    o_ref[...] = (jnp.dot(hs_ref[...].astype(jnp.bfloat16), wfc_ref[...],
                          preferred_element_type=jnp.float32)
                  + bfc_ref[...])


# ----------------------------- Module forward --------------------------------
@functools.partial(jax.jit, static_argnames=("hidden_size", "num_classes"))
def gru_module_forward(x, params, *, hidden_size, num_classes):
    B, T, I = x.shape
    H = hidden_size
    Ip = params["w_ih_t"].shape[0]            # lane-padded input dim (x128)
    Cp = params["w_fc_t"].shape[1]            # lane-padded class dim (128)

    # Time-major, sublane-dense, lane-padded bf16 input: row index = t*B + b.
    x_tm = jnp.transpose(x, (1, 0, 2)).reshape(T * B, I)
    x_tm = jnp.pad(x_tm, ((0, 0), (0, Ip - I))).astype(jnp.bfloat16)

    kernel = functools.partial(fused_gru_fc_kernel, seq_len=T, hidden=H)
    out = pl.pallas_call(
        kernel,
        out_shape=jax.ShapeDtypeStruct((B, Cp), jnp.float32),
        in_specs=[
            pl.BlockSpec((T * B, Ip), lambda: (0, 0)),
            pl.BlockSpec((Ip, 3 * H), lambda: (0, 0)),
            pl.BlockSpec((1, 3 * H), lambda: (0, 0)),
            pl.BlockSpec((H, 3 * H), lambda: (0, 0)),
            pl.BlockSpec((1, 3 * H), lambda: (0, 0)),
            pl.BlockSpec((T * H, Cp), lambda: (0, 0)),
            pl.BlockSpec((1, Cp), lambda: (0, 0)),
        ],
        out_specs=pl.BlockSpec((B, Cp), lambda: (0, 0)),
        scratch_shapes=[pltpu.VMEM((B, T * H), jnp.float32)],
        compiler_params=pltpu.CompilerParams(vmem_limit_bytes=32 * 1024 * 1024),
    )(x_tm, params["w_ih_t"], params["b_ih"], params["w_hh_t"], params["b_hh"],
      params["w_fc_t"], params["b_fc"])

    return out[:, :num_classes]


# ----------------------------- Parameter init --------------------------------
def init_params(key, input_size, hidden_size, num_classes, seq_len, c_pad=LANE):
    """Mirrors PyTorch GRU/Linear default init: uniform(-1/sqrt(fan), 1/sqrt(fan)).

    Gate order along the 3H dim is [r, z, n] (PyTorch convention). Biases stay
    separate (candidate gate uses r * (h @ W_hn + b_hn)) and in f32; the big
    weight matrices are stored bf16 for halved HBM traffic. w_ih is row-padded
    to a multiple of 128 on the input-feature dim; w_fc/b_fc are lane-padded to
    128 classes (wrapper slices back to num_classes).
    """
    H, I, C, T = hidden_size, input_size, num_classes, seq_len
    Ip = _round_up(I, LANE)
    k_gru = 1.0 / jnp.sqrt(H)
    k_fc = 1.0 / jnp.sqrt(H * T)
    ks = jax.random.split(key, 6)
    w_ih = jax.random.uniform(ks[0], (3 * H, I), jnp.float32, -k_gru, k_gru)
    w_hh = jax.random.uniform(ks[1], (3 * H, H), jnp.float32, -k_gru, k_gru)
    b_ih = jax.random.uniform(ks[2], (3 * H,), jnp.float32, -k_gru, k_gru)
    b_hh = jax.random.uniform(ks[3], (3 * H,), jnp.float32, -k_gru, k_gru)
    w_fc = jax.random.uniform(ks[4], (C, H * T), jnp.float32, -k_fc, k_fc)
    b_fc = jax.random.uniform(ks[5], (C,), jnp.float32, -k_fc, k_fc)

    cp = max(c_pad, C)
    w_ih_t = jnp.zeros((Ip, 3 * H), jnp.float32).at[:I, :].set(w_ih.T)
    w_fc_t = jnp.zeros((H * T, cp), jnp.float32).at[:, :C].set(w_fc.T)
    b_fc_p = jnp.zeros((1, cp), jnp.float32).at[:, :C].set(b_fc)
    return {
        "w_ih_t": w_ih_t.astype(jnp.bfloat16),     # (Ip, 3H)   bf16, zero-pad rows >= I
        "w_hh_t": w_hh.T.astype(jnp.bfloat16),     # (H, 3H)    bf16
        "b_ih": b_ih[None, :],                     # (1, 3H)    f32
        "b_hh": b_hh[None, :],                     # (1, 3H)    f32
        "w_fc_t": w_fc_t.astype(jnp.bfloat16),     # (H*T, 128) bf16, zero-pad cols >= C
        "b_fc": b_fc_p,                            # (1, 128)   f32, zero-pad cols >= C
    }


# ----------------------------- Pure-JAX reference ----------------------------
def reference_forward(x, params, num_classes):
    B, T, I = x.shape
    H = params["w_hh_t"].shape[0]
    wih = params["w_ih_t"].astype(jnp.float32)[:I, :]
    whh = params["w_hh_t"].astype(jnp.float32)
    bih, bhh = params["b_ih"], params["b_hh"]
    h = jnp.zeros((B, H), jnp.float32)
    outs = []
    for t in range(T):
        gi = x[:, t, :] @ wih + bih
        gh = h @ whh + bhh
        r = jax.nn.sigmoid(gi[:, :H] + gh[:, :H])
        z = jax.nn.sigmoid(gi[:, H:2 * H] + gh[:, H:2 * H])
        n = jnp.tanh(gi[:, 2 * H:] + r * gh[:, 2 * H:])
        h = (1.0 - z) * n + z * h
        outs.append(h)
    out = jnp.stack(outs, axis=1).reshape(B, -1)
    wfc = params["w_fc_t"].astype(jnp.float32)[:, :num_classes]
    bfc = params["b_fc"][:, :num_classes]
    return out @ wfc + bfc


if __name__ == "__main__":
    # Module constants: input_size=784, hidden_size=256, num_classes=10,
    # num_layers=1, sequence_length=1. Small batch (multiple of 8 sublanes).
    B, T, I, H, C = 8, 1, 784, 256, 10

    key = jax.random.PRNGKey(0)
    kx, kp = jax.random.split(key)
    x = jax.random.normal(kx, (B, T, I), jnp.float32)
    params = init_params(kp, I, H, C, T)

    logits = gru_module_forward(x, params, hidden_size=H, num_classes=C)
    logits = jax.block_until_ready(logits)

    ref = reference_forward(x, params, C)
    assert logits.shape == (B, C), logits.shape
    max_err = float(jnp.max(jnp.abs(logits - ref)))
    # bf16 weight/activation rounding on the MXU paths -> looser tolerance.
    assert jnp.allclose(logits, ref, rtol=2e-2, atol=2e-2), max_err
    print("KERNEL_OK")
</pallas_src>

<mosaic_0001>
module attributes {stable_mosaic.version = 11 : i64} {
  func.func @fused_gru_fc_kernel(%arg0: memref<8x896xbf16, #tpu.memory_space<vmem>>, %arg1: memref<896x768xbf16, #tpu.memory_space<vmem>>, %arg2: memref<1x768xf32, #tpu.memory_space<vmem>>, %arg3: memref<256x768xbf16, #tpu.memory_space<vmem>>, %arg4: memref<1x768xf32, #tpu.memory_space<vmem>>, %arg5: memref<256x128xbf16, #tpu.memory_space<vmem>>, %arg6: memref<1x128xf32, #tpu.memory_space<vmem>>, %arg7: memref<8x128xf32, #tpu.memory_space<vmem>>, %arg8: memref<8x256xf32, #tpu.memory_space<vmem>>) attributes {dimension_semantics = [], scalar_prefetch = 0 : i64, scratch_operands = 1 : i64, tpu.core_type = #tpu.core_type<tc>} {
    %c0 = arith.constant 0 : index
    %c0_0 = arith.constant 0 : index
    %0 = vector.load %arg0[%c0, %c0_0] : memref<8x896xbf16, #tpu.memory_space<vmem>>, vector<8x896xbf16>
    %c0_1 = arith.constant 0 : index
    %c0_2 = arith.constant 0 : index
    %1 = vector.load %arg1[%c0_1, %c0_2] : memref<896x768xbf16, #tpu.memory_space<vmem>>, vector<896x768xbf16>
    %cst = arith.constant dense<0.000000e+00> : vector<8x768xf32>
    %2 = tpu.matmul %0, %1, %cst {dimension_numbers = #tpu.dot_dimension_numbers<[1], [0], [0], [1], [0, 0, 1, 1], [], []>} : vector<8x896xbf16>, vector<896x768xbf16>, vector<8x768xf32> -> vector<8x768xf32>
    %c0_3 = arith.constant 0 : index
    %c0_4 = arith.constant 0 : index
    %3 = vector.load %arg2[%c0_3, %c0_4] : memref<1x768xf32, #tpu.memory_space<vmem>>, vector<1x768xf32>
    %4 = vector.broadcast %3 : vector<1x768xf32> to vector<8x768xf32>
    %5 = arith.addf %2, %4 : vector<8x768xf32>
    %c0_5 = arith.constant 0 : index
    %c0_6 = arith.constant 0 : index
    %6 = vector.load %arg3[%c0_5, %c0_6] : memref<256x768xbf16, #tpu.memory_space<vmem>>, vector<256x768xbf16>
    %c0_7 = arith.constant 0 : index
    %c0_8 = arith.constant 0 : index
    %7 = vector.load %arg4[%c0_7, %c0_8] : memref<1x768xf32, #tpu.memory_space<vmem>>, vector<1x768xf32>
    %cst_9 = arith.constant 0.000000e+00 : f32
    %8 = vector.broadcast %cst_9 : f32 to vector<8x256xf32>
    %9 = arith.truncf %8 : vector<8x256xf32> to vector<8x256xbf16>
    %cst_10 = arith.constant dense<0.000000e+00> : vector<8x768xf32>
    %10 = tpu.matmul %9, %6, %cst_10 {dimension_numbers = #tpu.dot_dimension_numbers<[1], [0], [0], [1], [0, 0, 1, 1], [], []>} : vector<8x256xbf16>, vector<256x768xbf16>, vector<8x768xf32> -> vector<8x768xf32>
    %11 = vector.broadcast %7 : vector<1x768xf32> to vector<8x768xf32>
    %12 = arith.addf %10, %11 : vector<8x768xf32>
    %13 = vector.extract_strided_slice %5 {offsets = [0, 0], sizes = [8, 512], strides = [1, 1]} : vector<8x768xf32> to vector<8x512xf32>
    %14 = vector.extract_strided_slice %12 {offsets = [0, 0], sizes = [8, 512], strides = [1, 1]} : vector<8x768xf32> to vector<8x512xf32>
    %15 = arith.addf %13, %14 : vector<8x512xf32>
    %16 = arith.negf %15 : vector<8x512xf32>
    %17 = math.exp %16 : vector<8x512xf32>
    %cst_11 = arith.constant 1.000000e+00 : f32
    %18 = vector.broadcast %cst_11 : f32 to vector<8x512xf32>
    %19 = arith.addf %18, %17 : vector<8x512xf32>
    %20 = arith.divf %18, %19 : vector<8x512xf32>
    %21 = vector.extract_strided_slice %20 {offsets = [0, 0], sizes = [8, 256], strides = [1, 1]} : vector<8x512xf32> to vector<8x256xf32>
    %22 = vector.extract_strided_slice %20 {offsets = [0, 256], sizes = [8, 256], strides = [1, 1]} : vector<8x512xf32> to vector<8x256xf32>
    %23 = vector.extract_strided_slice %5 {offsets = [0, 512], sizes = [8, 256], strides = [1, 1]} : vector<8x768xf32> to vector<8x256xf32>
    %24 = vector.extract_strided_slice %12 {offsets = [0, 512], sizes = [8, 256], strides = [1, 1]} : vector<8x768xf32> to vector<8x256xf32>
    %25 = arith.mulf %21, %24 : vector<8x256xf32>
    %26 = arith.addf %23, %25 : vector<8x256xf32>
    %27 = math.tanh %26 : vector<8x256xf32>
    %cst_12 = arith.constant 1.000000e+00 : f32
    %28 = vector.broadcast %cst_12 : f32 to vector<8x256xf32>
    %29 = arith.subf %28, %22 : vector<8x256xf32>
    %30 = arith.mulf %29, %27 : vector<8x256xf32>
    %31 = arith.mulf %22, %8 : vector<8x256xf32>
    %32 = arith.addf %30, %31 : vector<8x256xf32>
    %c0_13 = arith.constant 0 : index
    %c0_14 = arith.constant 0 : index
    %33 = vector.load %arg8[%c0_13, %c0_14] : memref<8x256xf32, #tpu.memory_space<vmem>>, vector<8x256xf32>
    tpu.vector_store %arg8[%c0_13, %c0_14], %32 {strides = array<i32>} : memref<8x256xf32, #tpu.memory_space<vmem>>, vector<8x256xf32>,
    %c0_15 = arith.constant 0 : index
    %c0_16 = arith.constant 0 : index
    %34 = vector.load %arg8[%c0_15, %c0_16] : memref<8x256xf32, #tpu.memory_space<vmem>>, vector<8x256xf32>
    %35 = arith.truncf %34 : vector<8x256xf32> to vector<8x256xbf16>
    %c0_17 = arith.constant 0 : index
    %c0_18 = arith.constant 0 : index
    %36 = vector.load %arg5[%c0_17, %c0_18] : memref<256x128xbf16, #tpu.memory_space<vmem>>, vector<256x128xbf16>
    %cst_19 = arith.constant dense<0.000000e+00> : vector<8x128xf32>
    %37 = tpu.matmul %35, %36, %cst_19 {dimension_numbers = #tpu.dot_dimension_numbers<[1], [0], [0], [1], [0, 0, 1, 1], [], []>} : vector<8x256xbf16>, vector<256x128xbf16>, vector<8x128xf32> -> vector<8x128xf32>
    %c0_20 = arith.constant 0 : index
    %c0_21 = arith.constant 0 : index
    %38 = vector.load %arg6[%c0_20, %c0_21] : memref<1x128xf32, #tpu.memory_space<vmem>>, vector<1x128xf32>
    %39 = vector.broadcast %38 : vector<1x128xf32> to vector<8x128xf32>
    %40 = arith.addf %37, %39 : vector<8x128xf32>
    %c0_22 = arith.constant 0 : index
    %c0_23 = arith.constant 0 : index
    %41 = vector.load %arg7[%c0_22, %c0_23] : memref<8x128xf32, #tpu.memory_space<vmem>>, vector<8x128xf32>
    tpu.vector_store %arg7[%c0_22, %c0_23], %40 {strides = array<i32>} : memref<8x128xf32, #tpu.memory_space<vmem>>, vector<8x128xf32>,
    return
  }
}

</mosaic_0001>

<llo_original>
// kernel: gru_module_forward.1
$region0: #{gru_module_forward.1}
  #allocation0 [shape = 'u32[]', space=smem, size = 0x4, offset = 0x4, fixed_abs, tag = 'smem constant byte address 0x4 - core index']
  #allocation1 [shape = 'u32[72,128]{1,0:T(1,128)}', space=vmem, size = 0x9000, scoped, tag = 'internal scratch']
  #allocation2 [shape = 'f32[8,256]{1,0:T(8,128)}', space=vmem, size = 0x2000, scoped, tag = 'scratch operand']
  %s0 = inlined_call_operand.vmem [shape: bf16[8,896], index: 0, kind: input, shape index: {}]
  %s1 = inlined_call_operand.hbm [shape: bf16[896,768], index: 1, kind: input, shape index: {}]
  %s2 = inlined_call_operand.hbm [shape: f32[1,768], index: 2, kind: input, shape index: {}]
  %s3 = inlined_call_operand.hbm [shape: bf16[256,768], index: 3, kind: input, shape index: {}]
  %s4 = inlined_call_operand.hbm [shape: f32[1,768], index: 4, kind: input, shape index: {}]
  %s5 = inlined_call_operand.hbm [shape: bf16[256,128], index: 5, kind: input, shape index: {}]
  %s6 = inlined_call_operand.hbm [shape: f32[1,128], index: 6, kind: input, shape index: {}]
  %s7 = inlined_call_operand.hbm [shape: f32[8,128], index: 7, kind: output, shape index: {}]
  %s8 = sld [smem:[#allocation0]]
  $region62: #{gru_module_forward.1} parent=0
    _
  %s10 = ssub.s32 1, %s8
  %s11 = scalar_select 0, %s10, %s8
  $region1: #{gru_module_forward.1} parent=0
    #allocation3 [shape = 'u8[1376256]{0}', space=vmem, size = 0x150000, scoped, tag = 'input window, operand 1, single buffered']
    #allocation4 [shape = 's32[1]{0}', space=sflag, size = 0x4, scoped, tag = 'scoped memory for gru_module_forward.1']
    #allocation5 [shape = 's32[1]{0}', space=sflag, size = 0x4, scoped, tag = 'scoped memory for gru_module_forward.1']
    #allocation6 [shape = 'u8[3072]{0}', space=vmem, size = 0xc00, scoped, tag = 'input window, operand 2, single buffered']
    #allocation7 [shape = 's32[1]{0}', space=sflag, size = 0x4, scoped, tag = 'scoped memory for gru_module_forward.1']
    #allocation8 [shape = 'u8[393216]{0}', space=vmem, size = 0x60000, scoped, tag = 'input window, operand 3, single buffered']
    #allocation9 [shape = 'u8[3072]{0}', space=vmem, size = 0xc00, scoped, tag = 'input window, operand 4, single buffered']
    #allocation10 [shape = 's32[1]{0}', space=sflag, size = 0x4, scoped, tag = 'scoped memory for gru_module_forward.1']
    #allocation11 [shape = 'u8[65536]{0}', space=vmem, size = 0x10000, scoped, tag = 'input window, operand 5, single buffered']
    #allocation12 [shape = 'u8[512]{0}', space=vmem, size = 0x400, scoped, tag = 'input window, operand 6, single buffered']
    #allocation13 [shape = 's32[1]{0}', space=sflag, size = 0x4, scoped, tag = 'scoped memory for gru_module_forward.1']
    #allocation14 [shape = 'u8[4096]{0}', space=vmem, size = 0x1000, scoped, tag = 'output window, operand 0, single buffered']
    %12 = vsyncpa [#allocation4], 0
    %13 = vsyncpa [#allocation7], 0
    %14 = vsyncpa [#allocation10], 0
    %15 = vsyncpa [#allocation13], 0
    %16 = vsyncpa [#allocation5], 0
    // Predicated region
    $region2: #{gru_module_forward.1} parent=1 // pred_check
      _
    $region3: #{gru_module_forward.1} parent=1 // pred_check_branch
      %18 = sbr.rel (0) target = $region5
    $region4: #{gru_module_forward.1} parent=1 // pred_region
      _
    $region5: #{gru_module_forward.1} parent=1 // pred_fallthru
      _
    // Predicated region
    $region6: #{gru_module_forward.1} parent=1 // pred_check
      _
    $region7: #{gru_module_forward.1} parent=1 // pred_check_branch
      %20 = sbr.rel (0) target = $region9
    $region8: #{gru_module_forward.1} parent=1 // pred_region
      %22 = vsyncadd [#allocation4], 0
      %s23 = sshll.u32 %s1, 4
      %s24 = int_to_ptr.hbm [resolvable:$true] %s23
      %s25 = sshll.u32 [#allocation3], 4
      %s26 = int_to_ptr.vmem [resolvable:$true] %s25
      %31 = dma.hbm_to_vmem [thread:$0]  %s24, 43008, %s26, [#allocation4], 384, 384, 24
    $region9: #{gru_module_forward.1} parent=1 // pred_fallthru
      _
    // Predicated region
    $region10: #{gru_module_forward.1} parent=1 // pred_check
      _
    $region11: #{gru_module_forward.1} parent=1 // pred_check_branch
      %33 = sbr.rel (0) target = $region13
    $region12: #{gru_module_forward.1} parent=1 // pred_region
      %35 = vsyncadd [#allocation7], 0
      %s37 = sshll.u32 %s2, 4
      %s38 = int_to_ptr.hbm [resolvable:$true] %s37
      %s39 = sshll.u32 [#allocation6], 4
      %s40 = int_to_ptr.vmem [resolvable:$true] %s39
      %42 = dma.hbm_to_vmem [thread:$0]  %s38, 96, %s40, [#allocation7]
    $region13: #{gru_module_forward.1} parent=1 // pred_fallthru
      _
    // Predicated region
    $region14: #{gru_module_forward.1} parent=1 // pred_check
      _
    $region15: #{gru_module_forward.1} parent=1 // pred_check_branch
      %44 = sbr.rel (0) target = $region17
    $region16: #{gru_module_forward.1} parent=1 // pred_region
      %46 = vsyncadd [#allocation7], 0
      %s47 = sshll.u32 %s3, 4
      %s48 = int_to_ptr.hbm [resolvable:$true] %s47
      %s49 = sshll.u32 [#allocation8], 4
      %s50 = int_to_ptr.vmem [resolvable:$true] %s49
      %55 = dma.hbm_to_vmem [thread:$0]  %s48, 12288, %s50, [#allocation7], 384, 384, 24
    $region17: #{gru_module_forward.1} parent=1 // pred_fallthru
      _
    // Predicated region
    $region18: #{gru_module_forward.1} parent=1 // pred_check
      _
    $region19: #{gru_module_forward.1} parent=1 // pred_check_branch
      %57 = sbr.rel (0) target = $region21
    $region20: #{gru_module_forward.1} parent=1 // pred_region
      %59 = vsyncadd [#allocation10], 0
      %s61 = sshll.u32 %s4, 4
      %s62 = int_to_ptr.hbm [resolvable:$true] %s61
      %s63 = sshll.u32 [#allocation9], 4
      %s64 = int_to_ptr.vmem [resolvable:$true] %s63
      %66 = dma.hbm_to_vmem [thread:$0]  %s62, 96, %s64, [#allocation10]
    $region21: #{gru_module_forward.1} parent=1 // pred_fallthru
      _
    // Predicated region
    $region22: #{gru_module_forward.1} parent=1 // pred_check
      _
    $region23: #{gru_module_forward.1} parent=1 // pred_check_branch
      %68 = sbr.rel (0) target = $region25
    $region24: #{gru_module_forward.1} parent=1 // pred_region
      %70 = vsyncadd [#allocation10], 0
      %s71 = sshll.u32 %s5, 4
      %s72 = int_to_ptr.hbm [resolvable:$true] %s71
      %s73 = sshll.u32 [#allocation11], 4
      %s74 = int_to_ptr.vmem [resolvable:$true] %s73
      %79 = dma.hbm_to_vmem [thread:$0]  %s72, 2048, %s74, [#allocation10], 64, 64, 4
    $region25: #{gru_module_forward.1} parent=1 // pred_fallthru
      _
    // Predicated region
    $region26: #{gru_module_forward.1} parent=1 // pred_check
      _
    $region27: #{gru_module_forward.1} parent=1 // pred_check_branch
      %81 = sbr.rel (0) target = $region29
    $region28: #{gru_module_forward.1} parent=1 // pred_region
      %83 = vsyncadd [#allocation13], 0
      %s85 = sshll.u32 %s6, 4
      %s86 = int_to_ptr.hbm [resolvable:$true] %s85
      %s87 = sshll.u32 [#allocation12], 4
      %s88 = int_to_ptr.vmem [resolvable:$true] %s87
      %90 = dma.hbm_to_vmem [thread:$0]  %s86, 16, %s88, [#allocation13]
    $region29: #{gru_module_forward.1} parent=1 // pred_fallthru
      _
    // Predicated region
    $region30: #{gru_module_forward.1} parent=1 // pred_check
      _
    $region31: #{gru_module_forward.1} parent=1 // pred_check_branch
      %92 = sbr.rel (0) target = $region33
    $region32: #{gru_module_forward.1} parent=1 // pred_region
      %94 = dma.done [#allocation4], 43008
    $region33: #{gru_module_forward.1} parent=1 // pred_fallthru
      _
    // Predicated region
    $region34: #{gru_module_forward.1} parent=1 // pred_check
      _
    $region35: #{gru_module_forward.1} parent=1 // pred_check_branch
      %96 = sbr.rel (0) target = $region37
    $region36: #{gru_module_forward.1} parent=1 // pred_region
      %98 = dma.done [#allocation7], 96
    $region37: #{gru_module_forward.1} parent=1 // pred_fallthru
      _
    // Predicated region
    $region38: #{gru_module_forward.1} parent=1 // pred_check
      _
    $region39: #{gru_module_forward.1} parent=1 // pred_check_branch
      %100 = sbr.rel (0) target = $region41
    $region40: #{gru_module_forward.1} parent=1 // pred_region
      %102 = dma.done [#allocation7], 12288
    $region41: #{gru_module_forward.1} parent=1 // pred_fallthru
      _
    // Predicated region
    $region42: #{gru_module_forward.1} parent=1 // pred_check
      _
    $region43: #{gru_module_forward.1} parent=1 // pred_check_branch
      %104 = sbr.rel (0) target = $region45
    $region44: #{gru_module_forward.1} parent=1 // pred_region
      %106 = dma.done [#allocation10], 96
    $region45: #{gru_module_forward.1} parent=1 // pred_fallthru
      _
    // Predicated region
    $region46: #{gru_module_forward.1} parent=1 // pred_check
      _
    $region47: #{gru_module_forward.1} parent=1 // pred_check_branch
      %108 = sbr.rel (0) target = $region49
    $region48: #{gru_module_forward.1} parent=1 // pred_region
      %110 = dma.done [#allocation10], 2048
    $region49: #{gru_module_forward.1} parent=1 // pred_fallthru
      _
    // Predicated region
    $region50: #{gru_module_forward.1} parent=1 // pred_check
      _
    $region51: #{gru_module_forward.1} parent=1 // pred_check_branch
      %112 = sbr.rel (0) target = $region53
    $region52: #{gru_module_forward.1} parent=1 // pred_region
      %114 = dma.done [#allocation13], 16
    $region53: #{gru_module_forward.1} parent=1 // pred_fallthru
      _
    %v116 = vld [vmem:[%s0] sm:$0xff]
    %v117 = vld [vmem:[%s0 + $0x8] sm:$0xff]
    %v118 = vld [vmem:[%s0 + $0x10] sm:$0xff]
    %v119 = vld [vmem:[%s0 + $0x18] sm:$0xf]
    %v120 = vld [vmem:[#allocation3] sm:$0xff]
    %v121 = vld [vmem:[#allocation3 + $0x8] sm:$0xff]
    %v122 = vld [vmem:[#allocation3 + $0x10] sm:$0xff]
    %v123 = vld [vmem:[#allocation3 + $0x18] sm:$0xff]
    %v124 = vld [vmem:[#allocation3 + $0x20] sm:$0xff]
    %v125 = vld [vmem:[#allocation3 + $0x28] sm:$0xff]
    %v126 = vld [vmem:[#allocation3 + $0x30] sm:$0xff]
    %v127 = vld [vmem:[#allocation3 + $0x38] sm:$0xff]
    %v128 = vld [vmem:[#allocation3 + $0x40] sm:$0xff]
    %v129 = vld [vmem:[#allocation3 + $0x48] sm:$0xff]
    %v130 = vld [vmem:[#allocation3 + $0x50] sm:$0xff]
    %v131 = vld [vmem:[#allocation3 + $0x58] sm:$0xff]
    %v132 = vld [vmem:[#allocation3 + $0x60] sm:$0xff]
    %v133 = vld [vmem:[#allocation3 + $0x68] sm:$0xff]
    %v134 = vld [vmem:[#allocation3 + $0x70] sm:$0xff]
    %v135 = vld [vmem:[#allocation3 + $0x78] sm:$0xff]
    %v136 = vld [vmem:[#allocation3 + $0x80] sm:$0xff]
    %v137 = vld [vmem:[#allocation3 + $0x88] sm:$0xff]
    %v138 = vld [vmem:[#allocation3 + $0x90] sm:$0xff]
    %v139 = vld [vmem:[#allocation3 + $0x98] sm:$0xff]
    %v140 = vld [vmem:[#allocation3 + $0xa0] sm:$0xff]
    %v141 = vld [vmem:[#allocation3 + $0xa8] sm:$0xff]
    %v142 = vld [vmem:[#allocation3 + $0xb0] sm:$0xff]
    %v143 = vld [vmem:[#allocation3 + $0xb8] sm:$0xff]
    %v144 = vld [vmem:[#allocation3 + $0xc0] sm:$0xff]
    %v145 = vld [vmem:[#allocation3 + $0xc8] sm:$0xff]
    %v146 = vld [vmem:[#allocation3 + $0xd0] sm:$0xff]
    %v147 = vld [vmem:[#allocation3 + $0xd8] sm:$0xff]
    %v148 = vld [vmem:[#allocation3 + $0xe0] sm:$0xff]
    %v149 = vld [vmem:[#allocation3 + $0xe8] sm:$0xff]
    %v150 = vld [vmem:[#allocation3 + $0xf0] sm:$0xff]
    %v151 = vld [vmem:[#allocation3 + $0xf8] sm:$0xff]
    %v152 = vld [vmem:[#allocation3 + $0x100] sm:$0xff]
    %v153 = vld [vmem:[#allocation3 + $0x108] sm:$0xff]
    %v154 = vld [vmem:[#allocation3 + $0x110] sm:$0xff]
    %v155 = vld [vmem:[#allocation3 + $0x118] sm:$0xff]
    %v156 = vld [vmem:[#allocation3 + $0x120] sm:$0xff]
    %v157 = vld [vmem:[#allocation3 + $0x128] sm:$0xff]
    %v158 = vld [vmem:[#allocation3 + $0x130] sm:$0xff]
    %v159 = vld [vmem:[#allocation3 + $0x138] sm:$0xff]
    %v160 = vld [vmem:[#allocation3 + $0x140] sm:$0xff]
    %v161 = vld [vmem:[#allocation3 + $0x148] sm:$0xff]
    %v162 = vld [vmem:[#allocation3 + $0x150] sm:$0xff]
    %v163 = vld [vmem:[#allocation3 + $0x158] sm:$0xff]
    %v164 = vld [vmem:[#allocation3 + $0x160] sm:$0xff]
    %v165 = vld [vmem:[#allocation3 + $0x168] sm:$0xff]
    %v166 = vld [vmem:[#allocation3 + $0x170] sm:$0xff]
    %v167 = vld [vmem:[#allocation3 + $0x178] sm:$0xff]
    %v168 = vld [vmem:[#allocation3 + $0x180] sm:$0xff]
    %v169 = vld [vmem:[#allocation3 + $0x188] sm:$0xff]
    %v170 = vld [vmem:[#allocation3 + $0x190] sm:$0xff]
    %v171 = vld [vmem:[#allocation3 + $0x198] sm:$0xff]
    %v172 = vld [vmem:[#allocation3 + $0x1a0] sm:$0xff]
    %v173 = vld [vmem:[#allocation3 + $0x1a8] sm:$0xff]
    %v174 = vld [vmem:[#allocation3 + $0x1b0] sm:$0xff]
    %v175 = vld [vmem:[#allocation3 + $0x1b8] sm:$0xff]
    %v176 = vld [vmem:[#allocation3 + $0x1c0] sm:$0xff]
    %v177 = vld [vmem:[#allocation3 + $0x1c8] sm:$0xff]
    %v178 = vld [vmem:[#allocation3 + $0x1d0] sm:$0xff]
    %v179 = vld [vmem:[#allocation3 + $0x1d8] sm:$0xff]
    %v180 = vld [vmem:[#allocation3 + $0x1e0] sm:$0xff]
    %v181 = vld [vmem:[#allocation3 + $0x1e8] sm:$0xff]
    %v182 = vld [vmem:[#allocation3 + $0x1f0] sm:$0xff]
    %v183 = vld [vmem:[#allocation3 + $0x1f8] sm:$0xff]
    %v184 = vld [vmem:[#allocation3 + $0x200] sm:$0xff]
    %v185 = vld [vmem:[#allocation3 + $0x208] sm:$0xff]
    %v186 = vld [vmem:[#allocation3 + $0x210] sm:$0xff]
    %v187 = vld [vmem:[#allocation3 + $0x218] sm:$0xff]
    %v188 = vld [vmem:[#allocation3 + $0x220] sm:$0xff]
    %v189 = vld [vmem:[#allocation3 + $0x228] sm:$0xff]
    %v190 = vld [vmem:[#allocation3 + $0x230] sm:$0xff]
    %v191 = vld [vmem:[#allocation3 + $0x238] sm:$0xff]
    %v192 = vld [vmem:[#allocation3 + $0x240] sm:$0xff]
    %v193 = vld [vmem:[#allocation3 + $0x248] sm:$0xff]
    %v194 = vld [vmem:[#allocation3 + $0x250] sm:$0xff]
    %v195 = vld [vmem:[#allocation3 + $0x258] sm:$0xff]
    %v196 = vld [vmem:[#allocation3 + $0x260] sm:$0xff]
    %v197 = vld [vmem:[#allocation3 + $0x268] sm:$0xff]
    %v198 = vld [vmem:[#allocation3 + $0x270] sm:$0xff]
    %v199 = vld [vmem:[#allocation3 + $0x278] sm:$0xff]
    %v200 = vld [vmem:[#allocation3 + $0x280] sm:$0xff]
    %v201 = vld [vmem:[#allocation3 + $0x288] sm:$0xff]
    %v202 = vld [vmem:[#allocation3 + $0x290] sm:$0xff]
    %v203 = vld [vmem:[#allocation3 + $0x298] sm:$0xff]
    %v204 = vld [vmem:[#allocation3 + $0x2a0] sm:$0xff]
    %v205 = vld [vmem:[#allocation3 + $0x2a8] sm:$0xff]
    %v206 = vld [vmem:[#allocation3 + $0x2b0] sm:$0xff]
    %v207 = vld [vmem:[#allocation3 + $0x2b8] sm:$0xff]
    %v208 = vld [vmem:[#allocation3 + $0x2c0] sm:$0xff]
    %v209 = vld [vmem:[#allocation3 + $0x2c8] sm:$0xff]
    %v210 = vld [vmem:[#allocation3 + $0x2d0] sm:$0xff]
    %v211 = vld [vmem:[#allocation3 + $0x2d8] sm:$0xff]
    %v212 = vld [vmem:[#allocation3 + $0x2e0] sm:$0xff]
    %v213 = vld [vmem:[#allocation3 + $0x2e8] sm:$0xff]
    %v214 = vld [vmem:[#allocation3 + $0x2f0] sm:$0xff]
    %v215 = vld [vmem:[#allocation3 + $0x2f8] sm:$0xff]
    %v216 = vld [vmem:[#allocation3 + $0x300] sm:$0xff]
    %v217 = vld [vmem:[#allocation3 + $0x308] sm:$0xff]
    %v218 = vld [vmem:[#allocation3 + $0x310] sm:$0xff]
    %v219 = vld [vmem:[#allocation3 + $0x318] sm:$0xff]
    %v220 = vld [vmem:[#allocation3 + $0x320] sm:$0xff]
    %v221 = vld [vmem:[#allocation3 + $0x328] sm:$0xff]
    %v222 = vld [vmem:[#allocation3 + $0x330] sm:$0xff]
    %v223 = vld [vmem:[#allocation3 + $0x338] sm:$0xff]
    %v224 = vld [vmem:[#allocation3 + $0x340] sm:$0xff]
    %v225 = vld [vmem:[#allocation3 + $0x348] sm:$0xff]
    %v226 = vld [vmem:[#allocation3 + $0x350] sm:$0xff]
    %v227 = vld [vmem:[#allocation3 + $0x358] sm:$0xff]
    %v228 = vld [vmem:[#allocation3 + $0x360] sm:$0xff]
    %v229 = vld [vmem:[#allocation3 + $0x368] sm:$0xff]
    %v230 = vld [vmem:[#allocation3 + $0x370] sm:$0xff]
    %v231 = vld [vmem:[#allocation3 + $0x378] sm:$0xff]
    %v232 = vld [vmem:[#allocation3 + $0x380] sm:$0xff]
    %v233 = vld [vmem:[#allocation3 + $0x388] sm:$0xff]
    %v234 = vld [vmem:[#allocation3 + $0x390] sm:$0xff]
    %v235 = vld [vmem:[#allocation3 + $0x398] sm:$0xff]
    %v236 = vld [vmem:[#allocation3 + $0x3a0] sm:$0xff]
    %v237 = vld [vmem:[#allocation3 + $0x3a8] sm:$0xff]
    %v238 = vld [vmem:[#allocation3 + $0x3b0] sm:$0xff]
    %v239 = vld [vmem:[#allocation3 + $0x3b8] sm:$0xff]
    %v240 = vld [vmem:[#allocation3 + $0x3c0] sm:$0xff]
    %v241 = vld [vmem:[#allocation3 + $0x3c8] sm:$0xff]
    %v242 = vld [vmem:[#allocation3 + $0x3d0] sm:$0xff]
    %v243 = vld [vmem:[#allocation3 + $0x3d8] sm:$0xff]
    %v244 = vld [vmem:[#allocation3 + $0x3e0] sm:$0xff]
    %v245 = vld [vmem:[#allocation3 + $0x3e8] sm:$0xff]
    %v246 = vld [vmem:[#allocation3 + $0x3f0] sm:$0xff]
    %v247 = vld [vmem:[#allocation3 + $0x3f8] sm:$0xff]
    %v248 = vld [vmem:[#allocation3 + $0x400] sm:$0xff]
    %v249 = vld [vmem:[#allocation3 + $0x408] sm:$0xff]
    %v250 = vld [vmem:[#allocation3 + $0x410] sm:$0xff]
    %v251 = vld [vmem:[#allocation3 + $0x418] sm:$0xff]
    %v252 = vld [vmem:[#allocation3 + $0x420] sm:$0xff]
    %v253 = vld [vmem:[#allocation3 + $0x428] sm:$0xff]
    %v254 = vld [vmem:[#allocation3 + $0x430] sm:$0xff]
    %v255 = vld [vmem:[#allocation3 + $0x438] sm:$0xff]
    %v256 = vld [vmem:[#allocation3 + $0x440] sm:$0xff]
    %v257 = vld [vmem:[#allocation3 + $0x448] sm:$0xff]
    %v258 = vld [vmem:[#allocation3 + $0x450] sm:$0xff]
    %v259 = vld [vmem:[#allocation3 + $0x458] sm:$0xff]
    %v260 = vld [vmem:[#allocation3 + $0x460] sm:$0xff]
    %v261 = vld [vmem:[#allocation3 + $0x468] sm:$0xff]
    %v262 = vld [vmem:[#allocation3 + $0x470] sm:$0xff]
    %v263 = vld [vmem:[#allocation3 + $0x478] sm:$0xff]
    %v264 = vld [vmem:[#allocation3 + $0x480] sm:$0xff]
    %v265 = vld [vmem:[#allocation3 + $0x488] sm:$0xff]
    %v266 = vld [vmem:[#allocation3 + $0x490] sm:$0xff]
    %v267 = vld [vmem:[#allocation3 + $0x498] sm:$0xff]
    %v268 = vld [vmem:[#allocation3 + $0x4a0] sm:$0xff]
    %v269 = vld [vmem:[#allocation3 + $0x4a8] sm:$0xff]
    %v270 = vld [vmem:[#allocation3 + $0x4b0] sm:$0xff]
    %v271 = vld [vmem:[#allocation3 + $0x4b8] sm:$0xff]
    %v272 = vld [vmem:[#allocation3 + $0x4c0] sm:$0xff]
    %v273 = vld [vmem:[#allocation3 + $0x4c8] sm:$0xff]
    %v274 = vld [vmem:[#allocation3 + $0x4d0] sm:$0xff]
    %v275 = vld [vmem:[#allocation3 + $0x4d8] sm:$0xff]
    %v276 = vld [vmem:[#allocation3 + $0x4e0] sm:$0xff]
    %v277 = vld [vmem:[#allocation3 + $0x4e8] sm:$0xff]
    %v278 = vld [vmem:[#allocation3 + $0x4f0] sm:$0xff]
    %v279 = vld [vmem:[#allocation3 + $0x4f8] sm:$0xff]
    %v280 = vld [vmem:[#allocation3 + $0x500] sm:$0xff]
    %v281 = vld [vmem:[#allocation3 + $0x508] sm:$0xff]
    %v282 = vld [vmem:[#allocation3 + $0x510] sm:$0xff]
    %v283 = vld [vmem:[#allocation3 + $0x518] sm:$0xff]
    %v284 = vld [vmem:[#allocation3 + $0x520] sm:$0xff]
    %v285 = vld [vmem:[#allocation3 + $0x528] sm:$0xff]
    %v286 = vld [vmem:[#allocation3 + $0x530] sm:$0xff]
    %v287 = vld [vmem:[#allocation3 + $0x538] sm:$0xff]
    %v288 = vld [vmem:[#allocation3 + $0x540] sm:$0xff]
    %v289 = vld [vmem:[#allocation3 + $0x548] sm:$0xff]
    %v290 = vld [vmem:[#allocation3 + $0x550] sm:$0xff]
    %v291 = vld [vmem:[#allocation3 + $0x558] sm:$0xff]
    %v292 = vld [vmem:[#allocation3 + $0x560] sm:$0xff]
    %v293 = vld [vmem:[#allocation3 + $0x568] sm:$0xff]
    %v294 = vld [vmem:[#allocation3 + $0x570] sm:$0xff]
    %v295 = vld [vmem:[#allocation3 + $0x578] sm:$0xff]
    %v296 = vld [vmem:[#allocation3 + $0x580] sm:$0xff]
    %v297 = vld [vmem:[#allocation3 + $0x588] sm:$0xff]
    %v298 = vld [vmem:[#allocation3 + $0x590] sm:$0xff]
    %v299 = vld [vmem:[#allocation3 + $0x598] sm:$0xff]
    %v300 = vld [vmem:[#allocation3 + $0x5a0] sm:$0xff]
    %v301 = vld [vmem:[#allocation3 + $0x5a8] sm:$0xff]
    %v302 = vld [vmem:[#allocation3 + $0x5b0] sm:$0xff]
    %v303 = vld [vmem:[#allocation3 + $0x5b8] sm:$0xff]
    %v304 = vld [vmem:[#allocation3 + $0x5c0] sm:$0xff]
    %v305 = vld [vmem:[#allocation3 + $0x5c8] sm:$0xff]
    %v306 = vld [vmem:[#allocation3 + $0x5d0] sm:$0xff]
    %v307 = vld [vmem:[#allocation3 + $0x5d8] sm:$0xff]
    %v308 = vld [vmem:[#allocation3 + $0x5e0] sm:$0xff]
    %v309 = vld [vmem:[#allocation3 + $0x5e8] sm:$0xff]
    %v310 = vld [vmem:[#allocation3 + $0x5f0] sm:$0xff]
    %v311 = vld [vmem:[#allocation3 + $0x5f8] sm:$0xff]
    %v312 = vld [vmem:[#allocation3 + $0x600] sm:$0xff]
    %v313 = vld [vmem:[#allocation3 + $0x608] sm:$0xff]
    %v314 = vld [vmem:[#allocation3 + $0x610] sm:$0xff]
    %v315 = vld [vmem:[#allocation3 + $0x618] sm:$0xff]
    %v316 = vld [vmem:[#allocation3 + $0x620] sm:$0xff]
    %v317 = vld [vmem:[#allocation3 + $0x628] sm:$0xff]
    %v318 = vld [vmem:[#allocation3 + $0x630] sm:$0xff]
    %v319 = vld [vmem:[#allocation3 + $0x638] sm:$0xff]
    %v320 = vld [vmem:[#allocation3 + $0x640] sm:$0xff]
    %v321 = vld [vmem:[#allocation3 + $0x648] sm:$0xff]
    %v322 = vld [vmem:[#allocation3 + $0x650] sm:$0xff]
    %v323 = vld [vmem:[#allocation3 + $0x658] sm:$0xff]
    %v324 = vld [vmem:[#allocation3 + $0x660] sm:$0xff]
    %v325 = vld [vmem:[#allocation3 + $0x668] sm:$0xff]
    %v326 = vld [vmem:[#allocation3 + $0x670] sm:$0xff]
    %v327 = vld [vmem:[#allocation3 + $0x678] sm:$0xff]
    %v328 = vld [vmem:[#allocation3 + $0x680] sm:$0xff]
    %v329 = vld [vmem:[#allocation3 + $0x688] sm:$0xff]
    %v330 = vld [vmem:[#allocation3 + $0x690] sm:$0xff]
    %v331 = vld [vmem:[#allocation3 + $0x698] sm:$0xff]
    %v332 = vld [vmem:[#allocation3 + $0x6a0] sm:$0xff]
    %v333 = vld [vmem:[#allocation3 + $0x6a8] sm:$0xff]
    %v334 = vld [vmem:[#allocation3 + $0x6b0] sm:$0xff]
    %v335 = vld [vmem:[#allocation3 + $0x6b8] sm:$0xff]
    %v336 = vld [vmem:[#allocation3 + $0x6c0] sm:$0xff]
    %v337 = vld [vmem:[#allocation3 + $0x6c8] sm:$0xff]
    %v338 = vld [vmem:[#allocation3 + $0x6d0] sm:$0xff]
    %v339 = vld [vmem:[#allocation3 + $0x6d8] sm:$0xff]
    %v340 = vld [vmem:[#allocation3 + $0x6e0] sm:$0xff]
    %v341 = vld [vmem:[#allocation3 + $0x6e8] sm:$0xff]
    %v342 = vld [vmem:[#allocation3 + $0x6f0] sm:$0xff]
    %v343 = vld [vmem:[#allocation3 + $0x6f8] sm:$0xff]
    %v344 = vld [vmem:[#allocation3 + $0x700] sm:$0xff]
    %v345 = vld [vmem:[#allocation3 + $0x708] sm:$0xff]
    %v346 = vld [vmem:[#allocation3 + $0x710] sm:$0xff]
    %v347 = vld [vmem:[#allocation3 + $0x718] sm:$0xff]
    %v348 = vld [vmem:[#allocation3 + $0x720] sm:$0xff]
    %v349 = vld [vmem:[#allocation3 + $0x728] sm:$0xff]
    %v350 = vld [vmem:[#allocation3 + $0x730] sm:$0xff]
    %v351 = vld [vmem:[#allocation3 + $0x738] sm:$0xff]
    %v352 = vld [vmem:[#allocation3 + $0x740] sm:$0xff]
    %v353 = vld [vmem:[#allocation3 + $0x748] sm:$0xff]
    %v354 = vld [vmem:[#allocation3 + $0x750] sm:$0xff]
    %v355 = vld [vmem:[#allocation3 + $0x758] sm:$0xff]
    %v356 = vld [vmem:[#allocation3 + $0x760] sm:$0xff]
    %v357 = vld [vmem:[#allocation3 + $0x768] sm:$0xff]
    %v358 = vld [vmem:[#allocation3 + $0x770] sm:$0xff]
    %v359 = vld [vmem:[#allocation3 + $0x778] sm:$0xff]
    %v360 = vld [vmem:[#allocation3 + $0x780] sm:$0xff]
    %v361 = vld [vmem:[#allocation3 + $0x788] sm:$0xff]
    %v362 = vld [vmem:[#allocation3 + $0x790] sm:$0xff]
    %v363 = vld [vmem:[#allocation3 + $0x798] sm:$0xff]
    %v364 = vld [vmem:[#allocation3 + $0x7a0] sm:$0xff]
    %v365 = vld [vmem:[#allocation3 + $0x7a8] sm:$0xff]
    %v366 = vld [vmem:[#allocation3 + $0x7b0] sm:$0xff]
    %v367 = vld [vmem:[#allocation3 + $0x7b8] sm:$0xff]
    %v368 = vld [vmem:[#allocation3 + $0x7c0] sm:$0xff]
    %v369 = vld [vmem:[#allocation3 + $0x7c8] sm:$0xff]
    %v370 = vld [vmem:[#allocation3 + $0x7d0] sm:$0xff]
    %v371 = vld [vmem:[#allocation3 + $0x7d8] sm:$0xff]
    %v372 = vld [vmem:[#allocation3 + $0x7e0] sm:$0xff]
    %v373 = vld [vmem:[#allocation3 + $0x7e8] sm:$0xff]
    %v374 = vld [vmem:[#allocation3 + $0x7f0] sm:$0xff]
    %v375 = vld [vmem:[#allocation3 + $0x7f8] sm:$0xff]
    %v376 = vld [vmem:[#allocation3 + $0x800] sm:$0xff]
    %v377 = vld [vmem:[#allocation3 + $0x808] sm:$0xff]
    %v378 = vld [vmem:[#allocation3 + $0x810] sm:$0xff]
    %v379 = vld [vmem:[#allocation3 + $0x818] sm:$0xff]
    %v380 = vld [vmem:[#allocation3 + $0x820] sm:$0xff]
    %v381 = vld [vmem:[#allocation3 + $0x828] sm:$0xff]
    %v382 = vld [vmem:[#allocation3 + $0x830] sm:$0xff]
    %v383 = vld [vmem:[#allocation3 + $0x838] sm:$0xff]
    %v384 = vld [vmem:[#allocation3 + $0x840] sm:$0xff]
    %v385 = vld [vmem:[#allocation3 + $0x848] sm:$0xff]
    %v386 = vld [vmem:[#allocation3 + $0x850] sm:$0xff]
    %v387 = vld [vmem:[#allocation3 + $0x858] sm:$0xff]
    %v388 = vld [vmem:[#allocation3 + $0x860] sm:$0xff]
    %v389 = vld [vmem:[#allocation3 + $0x868] sm:$0xff]
    %v390 = vld [vmem:[#allocation3 + $0x870] sm:$0xff]
    %v391 = vld [vmem:[#allocation3 + $0x878] sm:$0xff]
    %v392 = vld [vmem:[#allocation3 + $0x880] sm:$0xff]
    %v393 = vld [vmem:[#allocation3 + $0x888] sm:$0xff]
    %v394 = vld [vmem:[#allocation3 + $0x890] sm:$0xff]
    %v395 = vld [vmem:[#allocation3 + $0x898] sm:$0xff]
    %v396 = vld [vmem:[#allocation3 + $0x8a0] sm:$0xff]
    %v397 = vld [vmem:[#allocation3 + $0x8a8] sm:$0xff]
    %v398 = vld [vmem:[#allocation3 + $0x8b0] sm:$0xff]
    %v399 = vld [vmem:[#allocation3 + $0x8b8] sm:$0xff]
    %v400 = vld [vmem:[#allocation3 + $0x8c0] sm:$0xff]
    %v401 = vld [vmem:[#allocation3 + $0x8c8] sm:$0xff]
    %v402 = vld [vmem:[#allocation3 + $0x8d0] sm:$0xff]
    %v403 = vld [vmem:[#allocation3 + $0x8d8] sm:$0xff]
    %v404 = vld [vmem:[#allocation3 + $0x8e0] sm:$0xff]
    %v405 = vld [vmem:[#allocation3 + $0x8e8] sm:$0xff]
    %v406 = vld [vmem:[#allocation3 + $0x8f0] sm:$0xff]
    %v407 = vld [vmem:[#allocation3 + $0x8f8] sm:$0xff]
    %v408 = vld [vmem:[#allocation3 + $0x900] sm:$0xff]
    %v409 = vld [vmem:[#allocation3 + $0x908] sm:$0xff]
    %v410 = vld [vmem:[#allocation3 + $0x910] sm:$0xff]
    %v411 = vld [vmem:[#allocation3 + $0x918] sm:$0xff]
    %v412 = vld [vmem:[#allocation3 + $0x920] sm:$0xff]
    %v413 = vld [vmem:[#allocation3 + $0x928] sm:$0xff]
    %v414 = vld [vmem:[#allocation3 + $0x930] sm:$0xff]
    %v415 = vld [vmem:[#allocation3 + $0x938] sm:$0xff]
    %v416 = vld [vmem:[#allocation3 + $0x940] sm:$0xff]
    %v417 = vld [vmem:[#allocation3 + $0x948] sm:$0xff]
    %v418 = vld [vmem:[#allocation3 + $0x950] sm:$0xff]
    %v419 = vld [vmem:[#allocation3 + $0x958] sm:$0xff]
    %v420 = vld [vmem:[#allocation3 + $0x960] sm:$0xff]
    %v421 = vld [vmem:[#allocation3 + $0x968] sm:$0xff]
    %v422 = vld [vmem:[#allocation3 + $0x970] sm:$0xff]
    %v423 = vld [vmem:[#allocation3 + $0x978] sm:$0xff]
    %v424 = vld [vmem:[#allocation3 + $0x980] sm:$0xff]
    %v425 = vld [vmem:[#allocation3 + $0x988] sm:$0xff]
    %v426 = vld [vmem:[#allocation3 + $0x990] sm:$0xff]
    %v427 = vld [vmem:[#allocation3 + $0x998] sm:$0xff]
    %v428 = vld [vmem:[#allocation3 + $0x9a0] sm:$0xff]
    %v429 = vld [vmem:[#allocation3 + $0x9a8] sm:$0xff]
    %v430 = vld [vmem:[#allocation3 + $0x9b0] sm:$0xff]
    %v431 = vld [vmem:[#allocation3 + $0x9b8] sm:$0xff]
    %v432 = vld [vmem:[#allocation3 + $0x9c0] sm:$0xff]
    %v433 = vld [vmem:[#allocation3 + $0x9c8] sm:$0xff]
    %v434 = vld [vmem:[#allocation3 + $0x9d0] sm:$0xff]
    %v435 = vld [vmem:[#allocation3 + $0x9d8] sm:$0xff]
    %v436 = vld [vmem:[#allocation3 + $0x9e0] sm:$0xff]
    %v437 = vld [vmem:[#allocation3 + $0x9e8] sm:$0xff]
    %v438 = vld [vmem:[#allocation3 + $0x9f0] sm:$0xff]
    %v439 = vld [vmem:[#allocation3 + $0x9f8] sm:$0xff]
    %v440 = vld [vmem:[#allocation3 + $0xa00] sm:$0xff]
    %v441 = vld [vmem:[#allocation3 + $0xa08] sm:$0xff]
    %v442 = vld [vmem:[#allocation3 + $0xa10] sm:$0xff]
    %v443 = vld [vmem:[#allocation3 + $0xa18] sm:$0xff]
    %v444 = vld [vmem:[#allocation3 + $0xa20] sm:$0xff]
    %v445 = vld [vmem:[#allocation3 + $0xa28] sm:$0xff]
    %v446 = vld [vmem:[#allocation3 + $0xa30] sm:$0xff]
    %v447 = vld [vmem:[#allocation3 + $0xa38] sm:$0xff]
    %v448 = vld [vmem:[#allocation3 + $0xa40] sm:$0xff]
    %v449 = vld [vmem:[#allocation3 + $0xa48] sm:$0xff]
    %v450 = vld [vmem:[#allocation3 + $0xa50] sm:$0xff]
    %v451 = vld [vmem:[#allocation3 + $0xa58] sm:$0xff]
    %v452 = vld [vmem:[#allocation3 + $0xa60] sm:$0xff]
    %v453 = vld [vmem:[#allocation3 + $0xa68] sm:$0xff]
    %v454 = vld [vmem:[#allocation3 + $0xa70] sm:$0xff]
    %v455 = vld [vmem:[#allocation3 + $0xa78] sm:$0xff]
    %v456 = vld [vmem:[#allocation6] sm:$0x3f]
    %v458 = vperm.slane %v456, 0
    %v459 = vperm.slane %v456, 1
    %v460 = vperm.slane %v456, 2
    %v461 = vperm.slane %v456, 3
    %v462 = vperm.slane %v456, 4
    %v463 = vperm.slane %v456, 5
    %v474 = vunpack.c.l.b16 %v116
    %v475 = vunpack.c.h.b16 %v116
    %v476 = vunpack.c.l.b16 %v117
    %v477 = vunpack.c.h.b16 %v117
    %v478 = vunpack.c.l.b16 %v118
    %v479 = vunpack.c.h.b16 %v118
    %v480 = vunpack.c.l.b16 %v119
    %v481 = vpack.c.b16 %v474, %v474
    %v482 = vpack.c.b16 %v475, %v475
    %v483 = vpack.c.b16 %v476, %v476
    %v484 = vpack.c.b16 %v477, %v477
    %v485 = vpack.c.b16 %v478, %v478
    %v486 = vpack.c.b16 %v479, %v479
    %v487 = vpack.c.b16 %v480, %v480
    %v831 = vunpack.c.l.b16 %v120
    %v832 = vunpack.c.h.b16 %v120
    %v833 = vunpack.c.l.b16 %v121
    %v834 = vunpack.c.h.b16 %v121
    %v835 = vunpack.c.l.b16 %v122
    %v836 = vunpack.c.h.b16 %v122
    %v837 = vunpack.c.l.b16 %v123
    %v838 = vunpack.c.h.b16 %v123
    %v839 = vunpack.c.l.b16 %v124
    %v840 = vunpack.c.h.b16 %v124
    %v841 = vunpack.c.l.b16 %v125
    %v842 = vunpack.c.h.b16 %v125
    %v843 = vunpack.c.l.b16 %v126
    %v844 = vunpack.c.h.b16 %v126
    %v845 = vunpack.c.l.b16 %v127
    %v846 = vunpack.c.h.b16 %v127
    %v847 = vunpack.c.l.b16 %v128
    %v848 = vunpack.c.h.b16 %v128
    %v849 = vunpack.c.l.b16 %v129
    %v850 = vunpack.c.h.b16 %v129
    %v851 = vunpack.c.l.b16 %v130
    %v852 = vunpack.c.h.b16 %v130
    %v853 = vunpack.c.l.b16 %v131
    %v854 = vunpack.c.h.b16 %v131
    %v855 = vunpack.c.l.b16 %v132
    %v856 = vunpack.c.h.b16 %v132
    %v857 = vunpack.c.l.b16 %v133
    %v858 = vunpack.c.h.b16 %v133
    %v859 = vunpack.c.l.b16 %v134
    %v860 = vunpack.c.h.b16 %v134
    %v861 = vunpack.c.l.b16 %v135
    %v862 = vunpack.c.h.b16 %v135
    %v863 = vunpack.c.l.b16 %v136
    %v864 = vunpack.c.h.b16 %v136
    %v865 = vunpack.c.l.b16 %v137
    %v866 = vunpack.c.h.b16 %v137
    %v867 = vunpack.c.l.b16 %v138
    %v868 = vunpack.c.h.b16 %v138
    %v869 = vunpack.c.l.b16 %v139
    %v870 = vunpack.c.h.b16 %v139
    %v871 = vunpack.c.l.b16 %v140
    %v872 = vunpack.c.h.b16 %v140
    %v873 = vunpack.c.l.b16 %v141
    %v874 = vunpack.c.h.b16 %v141
    %v875 = vunpack.c.l.b16 %v142
    %v876 = vunpack.c.h.b16 %v142
    %v877 = vunpack.c.l.b16 %v143
    %v878 = vunpack.c.h.b16 %v143
    %v879 = vunpack.c.l.b16 %v144
    %v880 = vunpack.c.h.b16 %v144
    %v881 = vunpack.c.l.b16 %v145
    %v882 = vunpack.c.h.b16 %v145
    %v883 = vunpack.c.l.b16 %v146
    %v884 = vunpack.c.h.b16 %v146
    %v885 = vunpack.c.l.b16 %v147
    %v886 = vunpack.c.h.b16 %v147
    %v887 = vunpack.c.l.b16 %v148
    %v888 = vunpack.c.h.b16 %v148
    %v889 = vunpack.c.l.b16 %v149
    %v890 = vunpack.c.h.b16 %v149
    %v891 = vunpack.c.l.b16 %v150
    %v892 = vunpack.c.h.b16 %v150
    %v893 = vunpack.c.l.b16 %v151
    %v894 = vunpack.c.h.b16 %v151
    %v895 = vunpack.c.l.b16 %v152
    %v896 = vunpack.c.h.b16 %v152
    %v897 = vunpack.c.l.b16 %v153
    %v898 = vunpack.c.h.b16 %v153
    %v899 = vunpack.c.l.b16 %v154
    %v900 = vunpack.c.h.b16 %v154
    %v901 = vunpack.c.l.b16 %v155
    %v902 = vunpack.c.h.b16 %v155
    %v903 = vunpack.c.l.b16 %v156
    %v904 = vunpack.c.h.b16 %v156
    %v905 = vunpack.c.l.b16 %v157
    %v906 = vunpack.c.h.b16 %v157
    %v907 = vunpack.c.l.b16 %v158
    %v908 = vunpack.c.h.b16 %v158
    %v909 = vunpack.c.l.b16 %v159
    %v910 = vunpack.c.h.b16 %v159
    %v911 = vunpack.c.l.b16 %v160
    %v912 = vunpack.c.h.b16 %v160
    %v913 = vunpack.c.l.b16 %v161
    %v914 = vunpack.c.h.b16 %v161
    %v915 = vunpack.c.l.b16 %v162
    %v916 = vunpack.c.h.b16 %v162
    %v917 = vunpack.c.l.b16 %v163
    %v918 = vunpack.c.h.b16 %v163
    %v919 = vunpack.c.l.b16 %v164
    %v920 = vunpack.c.h.b16 %v164
    %v921 = vunpack.c.l.b16 %v165
    %v922 = vunpack.c.h.b16 %v165
    %v923 = vunpack.c.l.b16 %v166
    %v924 = vunpack.c.h.b16 %v166
    %v925 = vunpack.c.l.b16 %v167
    %v926 = vunpack.c.h.b16 %v167
    %v927 = vunpack.c.l.b16 %v168
    %v928 = vunpack.c.h.b16 %v168
    %v929 = vunpack.c.l.b16 %v169
    %v930 = vunpack.c.h.b16 %v169
    %v931 = vunpack.c.l.b16 %v170
    %v932 = vunpack.c.h.b16 %v170
    %v933 = vunpack.c.l.b16 %v171
    %v934 = vunpack.c.h.b16 %v171
    %v935 = vunpack.c.l.b16 %v172
    %v936 = vunpack.c.h.b16 %v172
    %v937 = vunpack.c.l.b16 %v173
    %v938 = vunpack.c.h.b16 %v173
    %v939 = vunpack.c.l.b16 %v174
    %v940 = vunpack.c.h.b16 %v174
    %v941 = vunpack.c.l.b16 %v175
    %v942 = vunpack.c.h.b16 %v175
    %v943 = vunpack.c.l.b16 %v176
    %v944 = vunpack.c.h.b16 %v176
    %v945 = vunpack.c.l.b16 %v177
    %v946 = vunpack.c.h.b16 %v177
    %v947 = vunpack.c.l.b16 %v178
    %v948 = vunpack.c.h.b16 %v178
    %v949 = vunpack.c.l.b16 %v179
    %v950 = vunpack.c.h.b16 %v179
    %v951 = vunpack.c.l.b16 %v180
    %v952 = vunpack.c.h.b16 %v180
    %v953 = vunpack.c.l.b16 %v181
    %v954 = vunpack.c.h.b16 %v181
    %v955 = vunpack.c.l.b16 %v182
    %v956 = vunpack.c.h.b16 %v182
    %v957 = vunpack.c.l.b16 %v183
    %v958 = vunpack.c.h.b16 %v183
    %v959 = vunpack.c.l.b16 %v184
    %v960 = vunpack.c.h.b16 %v184
    %v961 = vunpack.c.l.b16 %v185
    %v962 = vunpack.c.h.b16 %v185
    %v963 = vunpack.c.l.b16 %v186
    %v964 = vunpack.c.h.b16 %v186
    %v965 = vunpack.c.l.b16 %v187
    %v966 = vunpack.c.h.b16 %v187
    %v967 = vunpack.c.l.b16 %v188
    %v968 = vunpack.c.h.b16 %v188
    %v969 = vunpack.c.l.b16 %v189
    %v970 = vunpack.c.h.b16 %v189
    %v971 = vunpack.c.l.b16 %v190
    %v972 = vunpack.c.h.b16 %v190
    %v973 = vunpack.c.l.b16 %v191
    %v974 = vunpack.c.h.b16 %v191
    %v975 = vunpack.c.l.b16 %v192
    %v976 = vunpack.c.h.b16 %v192
    %v977 = vunpack.c.l.b16 %v193
    %v978 = vunpack.c.h.b16 %v193
    %v979 = vunpack.c.l.b16 %v194
    %v980 = vunpack.c.h.b16 %v194
    %v981 = vunpack.c.l.b16 %v195
    %v982 = vunpack.c.h.b16 %v195
    %v983 = vunpack.c.l.b16 %v196
    %v984 = vunpack.c.h.b16 %v196
    %v985 = vunpack.c.l.b16 %v197
    %v986 = vunpack.c.h.b16 %v197
    %v987 = vunpack.c.l.b16 %v198
    %v988 = vunpack.c.h.b16 %v198
    %v989 = vunpack.c.l.b16 %v199
    %v990 = vunpack.c.h.b16 %v199
    %v991 = vunpack.c.l.b16 %v200
    %v992 = vunpack.c.h.b16 %v200
    %v993 = vunpack.c.l.b16 %v201
    %v994 = vunpack.c.h.b16 %v201
    %v995 = vunpack.c.l.b16 %v202
    %v996 = vunpack.c.h.b16 %v202
    %v997 = vunpack.c.l.b16 %v203
    %v998 = vunpack.c.h.b16 %v203
    %v999 = vunpack.c.l.b16 %v204
    %v1000 = vunpack.c.h.b16 %v204
    %v1001 = vunpack.c.l.b16 %v205
    %v1002 = vunpack.c.h.b16 %v205
    %v1003 = vunpack.c.l.b16 %v206
    %v1004 = vunpack.c.h.b16 %v206
    %v1005 = vunpack.c.l.b16 %v207
    %v1006 = vunpack.c.h.b16 %v207
    %v1007 = vunpack.c.l.b16 %v208
    %v1008 = vunpack.c.h.b16 %v208
    %v1009 = vunpack.c.l.b16 %v209
    %v1010 = vunpack.c.h.b16 %v209
    %v1011 = vunpack.c.l.b16 %v210
    %v1012 = vunpack.c.h.b16 %v210
    %v1013 = vunpack.c.l.b16 %v211
    %v1014 = vunpack.c.h.b16 %v211
    %v1015 = vunpack.c.l.b16 %v212
    %v1016 = vunpack.c.h.b16 %v212
    %v1017 = vunpack.c.l.b16 %v213
    %v1018 = vunpack.c.h.b16 %v213
    %v1019 = vunpack.c.l.b16 %v214
    %v1020 = vunpack.c.h.b16 %v214
    %v1021 = vunpack.c.l.b16 %v215
    %v1022 = vunpack.c.h.b16 %v215
    %v1023 = vunpack.c.l.b16 %v216
    %v1024 = vunpack.c.h.b16 %v216
    %v1025 = vunpack.c.l.b16 %v217
    %v1026 = vunpack.c.h.b16 %v217
    %v1027 = vunpack.c.l.b16 %v218
    %v1028 = vunpack.c.h.b16 %v218
    %v1029 = vunpack.c.l.b16 %v219
    %v1030 = vunpack.c.h.b16 %v219
    %v1031 = vunpack.c.l.b16 %v220
    %v1032 = vunpack.c.h.b16 %v220
    %v1033 = vunpack.c.l.b16 %v221
    %v1034 = vunpack.c.h.b16 %v221
    %v1035 = vunpack.c.l.b16 %v222
    %v1036 = vunpack.c.h.b16 %v222
    %v1037 = vunpack.c.l.b16 %v223
    %v1038 = vunpack.c.h.b16 %v223
    %v1039 = vunpack.c.l.b16 %v224
    %v1040 = vunpack.c.h.b16 %v224
    %v1041 = vunpack.c.l.b16 %v225
    %v1042 = vunpack.c.h.b16 %v225
    %v1043 = vunpack.c.l.b16 %v226
    %v1044 = vunpack.c.h.b16 %v226
    %v1045 = vunpack.c.l.b16 %v227
    %v1046 = vunpack.c.h.b16 %v227
    %v1047 = vunpack.c.l.b16 %v228
    %v1048 = vunpack.c.h.b16 %v228
    %v1049 = vunpack.c.l.b16 %v229
    %v1050 = vunpack.c.h.b16 %v229
    %v1051 = vunpack.c.l.b16 %v230
    %v1052 = vunpack.c.h.b16 %v230
    %v1053 = vunpack.c.l.b16 %v231
    %v1054 = vunpack.c.h.b16 %v231
    %v1055 = vunpack.c.l.b16 %v232
    %v1056 = vunpack.c.h.b16 %v232
    %v1057 = vunpack.c.l.b16 %v233
    %v1058 = vunpack.c.h.b16 %v233
    %v1059 = vunpack.c.l.b16 %v234
    %v1060 = vunpack.c.h.b16 %v234
    %v1061 = vunpack.c.l.b16 %v235
    %v1062 = vunpack.c.h.b16 %v235
    %v1063 = vunpack.c.l.b16 %v236
    %v1064 = vunpack.c.h.b16 %v236
    %v1065 = vunpack.c.l.b16 %v237
    %v1066 = vunpack.c.h.b16 %v237
    %v1067 = vunpack.c.l.b16 %v238
    %v1068 = vunpack.c.h.b16 %v238
    %v1069 = vunpack.c.l.b16 %v239
    %v1070 = vunpack.c.h.b16 %v239
    %v1071 = vunpack.c.l.b16 %v240
    %v1072 = vunpack.c.h.b16 %v240
    %v1073 = vunpack.c.l.b16 %v241
    %v1074 = vunpack.c.h.b16 %v241
    %v1075 = vunpack.c.l.b16 %v242
    %v1076 = vunpack.c.h.b16 %v242
    %v1077 = vunpack.c.l.b16 %v243
    %v1078 = vunpack.c.h.b16 %v243
    %v1079 = vunpack.c.l.b16 %v244
    %v1080 = vunpack.c.h.b16 %v244
    %v1081 = vunpack.c.l.b16 %v245
    %v1082 = vunpack.c.h.b16 %v245
    %v1083 = vunpack.c.l.b16 %v246
    %v1084 = vunpack.c.h.b16 %v246
    %v1085 = vunpack.c.l.b16 %v247
    %v1086 = vunpack.c.h.b16 %v247
    %v1087 = vunpack.c.l.b16 %v248
    %v1088 = vunpack.c.h.b16 %v248
    %v1089 = vunpack.c.l.b16 %v249
    %v1090 = vunpack.c.h.b16 %v249
    %v1091 = vunpack.c.l.b16 %v250
    %v1092 = vunpack.c.h.b16 %v250
    %v1093 = vunpack.c.l.b16 %v251
    %v1094 = vunpack.c.h.b16 %v251
    %v1095 = vunpack.c.l.b16 %v252
    %v1096 = vunpack.c.h.b16 %v252
    %v1097 = vunpack.c.l.b16 %v253
    %v1098 = vunpack.c.h.b16 %v253
    %v1099 = vunpack.c.l.b16 %v254
    %v1100 = vunpack.c.h.b16 %v254
    %v1101 = vunpack.c.l.b16 %v255
    %v1102 = vunpack.c.h.b16 %v255
    %v1103 = vunpack.c.l.b16 %v256
    %v1104 = vunpack.c.h.b16 %v256
    %v1105 = vunpack.c.l.b16 %v257
    %v1106 = vunpack.c.h.b16 %v257
    %v1107 = vunpack.c.l.b16 %v258
    %v1108 = vunpack.c.h.b16 %v258
    %v1109 = vunpack.c.l.b16 %v259
    %v1110 = vunpack.c.h.b16 %v259
    %v1111 = vunpack.c.l.b16 %v260
    %v1112 = vunpack.c.h.b16 %v260
    %v1113 = vunpack.c.l.b16 %v261
    %v1114 = vunpack.c.h.b16 %v261
    %v1115 = vunpack.c.l.b16 %v262
    %v1116 = vunpack.c.h.b16 %v262
    %v1117 = vunpack.c.l.b16 %v263
    %v1118 = vunpack.c.h.b16 %v263
    %v1119 = vunpack.c.l.b16 %v264
    %v1120 = vunpack.c.h.b16 %v264
    %v1121 = vunpack.c.l.b16 %v265
    %v1122 = vunpack.c.h.b16 %v265
    %v1123 = vunpack.c.l.b16 %v266
    %v1124 = vunpack.c.h.b16 %v266
    %v1125 = vunpack.c.l.b16 %v267
    %v1126 = vunpack.c.h.b16 %v267
    %v1127 = vunpack.c.l.b16 %v268
    %v1128 = vunpack.c.h.b16 %v268
    %v1129 = vunpack.c.l.b16 %v269
    %v1130 = vunpack.c.h.b16 %v269
    %v1131 = vunpack.c.l.b16 %v270
    %v1132 = vunpack.c.h.b16 %v270
    %v1133 = vunpack.c.l.b16 %v271
    %v1134 = vunpack.c.h.b16 %v271
    %v1135 = vunpack.c.l.b16 %v272
    %v1136 = vunpack.c.h.b16 %v272
    %v1137 = vunpack.c.l.b16 %v273
    %v1138 = vunpack.c.h.b16 %v273
    %v1139 = vunpack.c.l.b16 %v274
    %v1140 = vunpack.c.h.b16 %v274
    %v1141 = vunpack.c.l.b16 %v275
    %v1142 = vunpack.c.h.b16 %v275
    %v1143 = vunpack.c.l.b16 %v276
    %v1144 = vunpack.c.h.b16 %v276
    %v1145 = vunpack.c.l.b16 %v277
    %v1146 = vunpack.c.h.b16 %v277
    %v1147 = vunpack.c.l.b16 %v278
    %v1148 = vunpack.c.h.b16 %v278
    %v1149 = vunpack.c.l.b16 %v279
    %v1150 = vunpack.c.h.b16 %v279
    %v1151 = vunpack.c.l.b16 %v280
    %v1152 = vunpack.c.h.b16 %v280
    %v1153 = vunpack.c.l.b16 %v281
    %v1154 = vunpack.c.h.b16 %v281
    %v1155 = vunpack.c.l.b16 %v282
    %v1156 = vunpack.c.h.b16 %v282
    %v1157 = vunpack.c.l.b16 %v283
    %v1158 = vunpack.c.h.b16 %v283
    %v1159 = vunpack.c.l.b16 %v284
    %v1160 = vunpack.c.h.b16 %v284
    %v1161 = vunpack.c.l.b16 %v285
    %v1162 = vunpack.c.h.b16 %v285
    %v1163 = vunpack.c.l.b16 %v286
    %v1164 = vunpack.c.h.b16 %v286
    %v1165 = vunpack.c.l.b16 %v287
    %v1166 = vunpack.c.h.b16 %v287
    %v1167 = vunpack.c.l.b16 %v288
    %v1168 = vunpack.c.h.b16 %v288
    %v1169 = vunpack.c.l.b16 %v289
    %v1170 = vunpack.c.h.b16 %v289
    %v1171 = vunpack.c.l.b16 %v290
    %v1172 = vunpack.c.h.b16 %v290
    %v1173 = vunpack.c.l.b16 %v291
    %v1174 = vunpack.c.h.b16 %v291
    %v1175 = vunpack.c.l.b16 %v292
    %v1176 = vunpack.c.h.b16 %v292
    %v1177 = vunpack.c.l.b16 %v293
    %v1178 = vunpack.c.h.b16 %v293
    %v1179 = vunpack.c.l.b16 %v294
    %v1180 = vunpack.c.h.b16 %v294
    %v1181 = vunpack.c.l.b16 %v295
    %v1182 = vunpack.c.h.b16 %v295
    %v1183 = vunpack.c.l.b16 %v296
    %v1184 = vunpack.c.h.b16 %v296
    %v1185 = vunpack.c.l.b16 %v297
    %v1186 = vunpack.c.h.b16 %v297
    %v1187 = vunpack.c.l.b16 %v298
    %v1188 = vunpack.c.h.b16 %v298
    %v1189 = vunpack.c.l.b16 %v299
    %v1190 = vunpack.c.h.b16 %v299
    %v1191 = vunpack.c.l.b16 %v300
    %v1192 = vunpack.c.h.b16 %v300
    %v1193 = vunpack.c.l.b16 %v301
    %v1194 = vunpack.c.h.b16 %v301
    %v1195 = vunpack.c.l.b16 %v302
    %v1196 = vunpack.c.h.b16 %v302
    %v1197 = vunpack.c.l.b16 %v303
    %v1198 = vunpack.c.h.b16 %v303
    %v1199 = vunpack.c.l.b16 %v304
    %v1200 = vunpack.c.h.b16 %v304
    %v1201 = vunpack.c.l.b16 %v305
    %v1202 = vunpack.c.h.b16 %v305
    %v1203 = vunpack.c.l.b16 %v306
    %v1204 = vunpack.c.h.b16 %v306
    %v1205 = vunpack.c.l.b16 %v307
    %v1206 = vunpack.c.h.b16 %v307
    %v1207 = vunpack.c.l.b16 %v308
    %v1208 = vunpack.c.h.b16 %v308
    %v1209 = vunpack.c.l.b16 %v309
    %v1210 = vunpack.c.h.b16 %v309
    %v1211 = vunpack.c.l.b16 %v310
    %v1212 = vunpack.c.h.b16 %v310
    %v1213 = vunpack.c.l.b16 %v311
    %v1214 = vunpack.c.h.b16 %v311
    %v1215 = vunpack.c.l.b16 %v312
    %v1216 = vunpack.c.h.b16 %v312
    %v1217 = vunpack.c.l.b16 %v313
    %v1218 = vunpack.c.h.b16 %v313
    %v1219 = vunpack.c.l.b16 %v314
    %v1220 = vunpack.c.h.b16 %v314
    %v1221 = vunpack.c.l.b16 %v315
    %v1222 = vunpack.c.h.b16 %v315
    %v1223 = vunpack.c.l.b16 %v316
    %v1224 = vunpack.c.h.b16 %v316
    %v1225 = vunpack.c.l.b16 %v317
    %v1226 = vunpack.c.h.b16 %v317
    %v1227 = vunpack.c.l.b16 %v318
    %v1228 = vunpack.c.h.b16 %v318
    %v1229 = vunpack.c.l.b16 %v319
    %v1230 = vunpack.c.h.b16 %v319
    %v1231 = vunpack.c.l.b16 %v320
    %v1232 = vunpack.c.h.b16 %v320
    %v1233 = vunpack.c.l.b16 %v321
    %v1234 = vunpack.c.h.b16 %v321
    %v1235 = vunpack.c.l.b16 %v322
    %v1236 = vunpack.c.h.b16 %v322
    %v1237 = vunpack.c.l.b16 %v323
    %v1238 = vunpack.c.h.b16 %v323
    %v1239 = vunpack.c.l.b16 %v324
    %v1240 = vunpack.c.h.b16 %v324
    %v1241 = vunpack.c.l.b16 %v325
    %v1242 = vunpack.c.h.b16 %v325
    %v1243 = vunpack.c.l.b16 %v326
    %v1244 = vunpack.c.h.b16 %v326
    %v1245 = vunpack.c.l.b16 %v327
    %v1246 = vunpack.c.h.b16 %v327
    %v1247 = vunpack.c.l.b16 %v328
    %v1248 = vunpack.c.h.b16 %v328
    %v1249 = vunpack.c.l.b16 %v329
    %v1250 = vunpack.c.h.b16 %v329
    %v1251 = vunpack.c.l.b16 %v330
    %v1252 = vunpack.c.h.b16 %v330
    %v1253 = vunpack.c.l.b16 %v331
    %v1254 = vunpack.c.h.b16 %v331
    %v1255 = vunpack.c.l.b16 %v332
    %v1256 = vunpack.c.h.b16 %v332
    %v1257 = vunpack.c.l.b16 %v333
    %v1258 = vunpack.c.h.b16 %v333
    %v1259 = vunpack.c.l.b16 %v334
    %v1260 = vunpack.c.h.b16 %v334
    %v1261 = vunpack.c.l.b16 %v335
    %v1262 = vunpack.c.h.b16 %v335
    %v1263 = vunpack.c.l.b16 %v336
    %v1264 = vunpack.c.h.b16 %v336
    %v1265 = vunpack.c.l.b16 %v337
    %v1266 = vunpack.c.h.b16 %v337
    %v1267 = vunpack.c.l.b16 %v338
    %v1268 = vunpack.c.h.b16 %v338
    %v1269 = vunpack.c.l.b16 %v339
    %v1270 = vunpack.c.h.b16 %v339
    %v1271 = vunpack.c.l.b16 %v340
    %v1272 = vunpack.c.h.b16 %v340
    %v1273 = vunpack.c.l.b16 %v341
    %v1274 = vunpack.c.h.b16 %v341
    %v1275 = vunpack.c.l.b16 %v342
    %v1276 = vunpack.c.h.b16 %v342
    %v1277 = vunpack.c.l.b16 %v343
    %v1278 = vunpack.c.h.b16 %v343
    %v1279 = vunpack.c.l.b16 %v344
    %v1280 = vunpack.c.h.b16 %v344
    %v1281 = vunpack.c.l.b16 %v345
    %v1282 = vunpack.c.h.b16 %v345
    %v1283 = vunpack.c.l.b16 %v346
    %v1284 = vunpack.c.h.b16 %v346
    %v1285 = vunpack.c.l.b16 %v347
    %v1286 = vunpack.c.h.b16 %v347
    %v1287 = vunpack.c.l.b16 %v348
    %v1288 = vunpack.c.h.b16 %v348
    %v1289 = vunpack.c.l.b16 %v349
    %v1290 = vunpack.c.h.b16 %v349
    %v1291 = vunpack.c.l.b16 %v350
    %v1292 = vunpack.c.h.b16 %v350
    %v1293 = vunpack.c.l.b16 %v351
    %v1294 = vunpack.c.h.b16 %v351
    %v1295 = vunpack.c.l.b16 %v352
    %v1296 = vunpack.c.h.b16 %v352
    %v1297 = vunpack.c.l.b16 %v353
    %v1298 = vunpack.c.h.b16 %v353
    %v1299 = vunpack.c.l.b16 %v354
    %v1300 = vunpack.c.h.b16 %v354
    %v1301 = vunpack.c.l.b16 %v355
    %v1302 = vunpack.c.h.b16 %v355
    %v1303 = vunpack.c.l.b16 %v356
    %v1304 = vunpack.c.h.b16 %v356
    %v1305 = vunpack.c.l.b16 %v357
    %v1306 = vunpack.c.h.b16 %v357
    %v1307 = vunpack.c.l.b16 %v358
    %v1308 = vunpack.c.h.b16 %v358
    %v1309 = vunpack.c.l.b16 %v359
    %v1310 = vunpack.c.h.b16 %v359
    %v1311 = vunpack.c.l.b16 %v360
    %v1312 = vunpack.c.h.b16 %v360
    %v1313 = vunpack.c.l.b16 %v361
    %v1314 = vunpack.c.h.b16 %v361
    %v1315 = vunpack.c.l.b16 %v362
    %v1316 = vunpack.c.h.b16 %v362
    %v1317 = vunpack.c.l.b16 %v363
    %v1318 = vunpack.c.h.b16 %v363
    %v1319 = vunpack.c.l.b16 %v364
    %v1320 = vunpack.c.h.b16 %v364
    %v1321 = vunpack.c.l.b16 %v365
    %v1322 = vunpack.c.h.b16 %v365
    %v1323 = vunpack.c.l.b16 %v366
    %v1324 = vunpack.c.h.b16 %v366
    %v1325 = vunpack.c.l.b16 %v367
    %v1326 = vunpack.c.h.b16 %v367
    %v1327 = vunpack.c.l.b16 %v368
    %v1328 = vunpack.c.h.b16 %v368
    %v1329 = vunpack.c.l.b16 %v369
    %v1330 = vunpack.c.h.b16 %v369
    %v1331 = vunpack.c.l.b16 %v370
    %v1332 = vunpack.c.h.b16 %v370
    %v1333 = vunpack.c.l.b16 %v371
    %v1334 = vunpack.c.h.b16 %v371
    %v1335 = vunpack.c.l.b16 %v372
    %v1336 = vunpack.c.h.b16 %v372
    %v1337 = vunpack.c.l.b16 %v373
    %v1338 = vunpack.c.h.b16 %v373
    %v1339 = vunpack.c.l.b16 %v374
    %v1340 = vunpack.c.h.b16 %v374
    %v1341 = vunpack.c.l.b16 %v375
    %v1342 = vunpack.c.h.b16 %v375
    %v1343 = vunpack.c.l.b16 %v376
    %v1344 = vunpack.c.h.b16 %v376
    %v1345 = vunpack.c.l.b16 %v377
    %v1346 = vunpack.c.h.b16 %v377
    %v1347 = vunpack.c.l.b16 %v378
    %v1348 = vunpack.c.h.b16 %v378
    %v1349 = vunpack.c.l.b16 %v379
    %v1350 = vunpack.c.h.b16 %v379
    %v1351 = vunpack.c.l.b16 %v380
    %v1352 = vunpack.c.h.b16 %v380
    %v1353 = vunpack.c.l.b16 %v381
    %v1354 = vunpack.c.h.b16 %v381
    %v1355 = vunpack.c.l.b16 %v382
    %v1356 = vunpack.c.h.b16 %v382
    %v1357 = vunpack.c.l.b16 %v383
    %v1358 = vunpack.c.h.b16 %v383
    %v1359 = vunpack.c.l.b16 %v384
    %v1360 = vunpack.c.h.b16 %v384
    %v1361 = vunpack.c.l.b16 %v385
    %v1362 = vunpack.c.h.b16 %v385
    %v1363 = vunpack.c.l.b16 %v386
    %v1364 = vunpack.c.h.b16 %v386
    %v1365 = vunpack.c.l.b16 %v387
    %v1366 = vunpack.c.h.b16 %v387
    %v1367 = vunpack.c.l.b16 %v388
    %v1368 = vunpack.c.h.b16 %v388
    %v1369 = vunpack.c.l.b16 %v389
    %v1370 = vunpack.c.h.b16 %v389
    %v1371 = vunpack.c.l.b16 %v390
    %v1372 = vunpack.c.h.b16 %v390
    %v1373 = vunpack.c.l.b16 %v391
    %v1374 = vunpack.c.h.b16 %v391
    %v1375 = vunpack.c.l.b16 %v392
    %v1376 = vunpack.c.h.b16 %v392
    %v1377 = vunpack.c.l.b16 %v393
    %v1378 = vunpack.c.h.b16 %v393
    %v1379 = vunpack.c.l.b16 %v394
    %v1380 = vunpack.c.h.b16 %v394
    %v1381 = vunpack.c.l.b16 %v395
    %v1382 = vunpack.c.h.b16 %v395
    %v1383 = vunpack.c.l.b16 %v396
    %v1384 = vunpack.c.h.b16 %v396
    %v1385 = vunpack.c.l.b16 %v397
    %v1386 = vunpack.c.h.b16 %v397
    %v1387 = vunpack.c.l.b16 %v398
    %v1388 = vunpack.c.h.b16 %v398
    %v1389 = vunpack.c.l.b16 %v399
    %v1390 = vunpack.c.h.b16 %v399
    %v1391 = vunpack.c.l.b16 %v400
    %v1392 = vunpack.c.h.b16 %v400
    %v1393 = vunpack.c.l.b16 %v401
    %v1394 = vunpack.c.h.b16 %v401
    %v1395 = vunpack.c.l.b16 %v402
    %v1396 = vunpack.c.h.b16 %v402
    %v1397 = vunpack.c.l.b16 %v403
    %v1398 = vunpack.c.h.b16 %v403
    %v1399 = vunpack.c.l.b16 %v404
    %v1400 = vunpack.c.h.b16 %v404
    %v1401 = vunpack.c.l.b16 %v405
    %v1402 = vunpack.c.h.b16 %v405
    %v1403 = vunpack.c.l.b16 %v406
    %v1404 = vunpack.c.h.b16 %v406
    %v1405 = vunpack.c.l.b16 %v407
    %v1406 = vunpack.c.h.b16 %v407
    %v1407 = vunpack.c.l.b16 %v408
    %v1408 = vunpack.c.h.b16 %v408
    %v1409 = vunpack.c.l.b16 %v409
    %v1410 = vunpack.c.h.b16 %v409
    %v1411 = vunpack.c.l.b16 %v410
    %v1412 = vunpack.c.h.b16 %v410
    %v1413 = vunpack.c.l.b16 %v411
    %v1414 = vunpack.c.h.b16 %v411
    %v1415 = vunpack.c.l.b16 %v412
    %v1416 = vunpack.c.h.b16 %v412
    %v1417 = vunpack.c.l.b16 %v413
    %v1418 = vunpack.c.h.b16 %v413
    %v1419 = vunpack.c.l.b16 %v414
    %v1420 = vunpack.c.h.b16 %v414
    %v1421 = vunpack.c.l.b16 %v415
    %v1422 = vunpack.c.h.b16 %v415
    %v1423 = vunpack.c.l.b16 %v416
    %v1424 = vunpack.c.h.b16 %v416
    %v1425 = vunpack.c.l.b16 %v417
    %v1426 = vunpack.c.h.b16 %v417
    %v1427 = vunpack.c.l.b16 %v418
    %v1428 = vunpack.c.h.b16 %v418
    %v1429 = vunpack.c.l.b16 %v419
    %v1430 = vunpack.c.h.b16 %v419
    %v1431 = vunpack.c.l.b16 %v420
    %v1432 = vunpack.c.h.b16 %v420
    %v1433 = vunpack.c.l.b16 %v421
    %v1434 = vunpack.c.h.b16 %v421
    %v1435 = vunpack.c.l.b16 %v422
    %v1436 = vunpack.c.h.b16 %v422
    %v1437 = vunpack.c.l.b16 %v423
    %v1438 = vunpack.c.h.b16 %v423
    %v1439 = vunpack.c.l.b16 %v424
    %v1440 = vunpack.c.h.b16 %v424
    %v1441 = vunpack.c.l.b16 %v425
    %v1442 = vunpack.c.h.b16 %v425
    %v1443 = vunpack.c.l.b16 %v426
    %v1444 = vunpack.c.h.b16 %v426
    %v1445 = vunpack.c.l.b16 %v427
    %v1446 = vunpack.c.h.b16 %v427
    %v1447 = vunpack.c.l.b16 %v428
    %v1448 = vunpack.c.h.b16 %v428
    %v1449 = vunpack.c.l.b16 %v429
    %v1450 = vunpack.c.h.b16 %v429
    %v1451 = vunpack.c.l.b16 %v430
    %v1452 = vunpack.c.h.b16 %v430
    %v1453 = vunpack.c.l.b16 %v431
    %v1454 = vunpack.c.h.b16 %v431
    %v1455 = vunpack.c.l.b16 %v432
    %v1456 = vunpack.c.h.b16 %v432
    %v1457 = vunpack.c.l.b16 %v433
    %v1458 = vunpack.c.h.b16 %v433
    %v1459 = vunpack.c.l.b16 %v434
    %v1460 = vunpack.c.h.b16 %v434
    %v1461 = vunpack.c.l.b16 %v435
    %v1462 = vunpack.c.h.b16 %v435
    %v1463 = vunpack.c.l.b16 %v436
    %v1464 = vunpack.c.h.b16 %v436
    %v1465 = vunpack.c.l.b16 %v437
    %v1466 = vunpack.c.h.b16 %v437
    %v1467 = vunpack.c.l.b16 %v438
    %v1468 = vunpack.c.h.b16 %v438
    %v1469 = vunpack.c.l.b16 %v439
    %v1470 = vunpack.c.h.b16 %v439
    %v1471 = vunpack.c.l.b16 %v440
    %v1472 = vunpack.c.h.b16 %v440
    %v1473 = vunpack.c.l.b16 %v441
    %v1474 = vunpack.c.h.b16 %v441
    %v1475 = vunpack.c.l.b16 %v442
    %v1476 = vunpack.c.h.b16 %v442
    %v1477 = vunpack.c.l.b16 %v443
    %v1478 = vunpack.c.h.b16 %v443
    %v1479 = vunpack.c.l.b16 %v444
    %v1480 = vunpack.c.h.b16 %v444
    %v1481 = vunpack.c.l.b16 %v445
    %v1482 = vunpack.c.h.b16 %v445
    %v1483 = vunpack.c.l.b16 %v446
    %v1484 = vunpack.c.h.b16 %v446
    %v1485 = vunpack.c.l.b16 %v447
    %v1486 = vunpack.c.h.b16 %v447
    %v1487 = vunpack.c.l.b16 %v448
    %v1488 = vunpack.c.h.b16 %v448
    %v1489 = vunpack.c.l.b16 %v449
    %v1490 = vunpack.c.h.b16 %v449
    %v1491 = vunpack.c.l.b16 %v450
    %v1492 = vunpack.c.h.b16 %v450
    %v1493 = vunpack.c.l.b16 %v451
    %v1494 = vunpack.c.h.b16 %v451
    %v1495 = vunpack.c.l.b16 %v452
    %v1496 = vunpack.c.h.b16 %v452
    %v1497 = vunpack.c.l.b16 %v453
    %v1498 = vunpack.c.h.b16 %v453
    %v1499 = vunpack.c.l.b16 %v454
    %v1500 = vunpack.c.h.b16 %v454
    %v1501 = vunpack.c.l.b16 %v455
    %v1502 = vunpack.c.h.b16 %v455
    %v1503 = vpack.c.b16 %v837, %v831
    %v1504 = vpack.c.b16 %v838, %v832
    %v1505 = vpack.c.b16 %v839, %v833
    %v1506 = vpack.c.b16 %v840, %v834
    %v1507 = vpack.c.b16 %v841, %v835
    %v1508 = vpack.c.b16 %v842, %v836
    %v1509 = vpack.c.b16 %v849, %v843
    %v1510 = vpack.c.b16 %v850, %v844
    %v1511 = vpack.c.b16 %v851, %v845
    %v1512 = vpack.c.b16 %v852, %v846
    %v1513 = vpack.c.b16 %v853, %v847
    %v1514 = vpack.c.b16 %v854, %v848
    %v1515 = vpack.c.b16 %v861, %v855
    %v1516 = vpack.c.b16 %v862, %v856
    %v1517 = vpack.c.b16 %v863, %v857
    %v1518 = vpack.c.b16 %v864, %v858
    %v1519 = vpack.c.b16 %v865, %v859
    %v1520 = vpack.c.b16 %v866, %v860
    %v1521 = vpack.c.b16 %v873, %v867
    %v1522 = vpack.c.b16 %v874, %v868
    %v1523 = vpack.c.b16 %v875, %v869
    %v1524 = vpack.c.b16 %v876, %v870
    %v1525 = vpack.c.b16 %v877, %v871
    %v1526 = vpack.c.b16 %v878, %v872
    %v1527 = vpack.c.b16 %v885, %v879
    %v1528 = vpack.c.b16 %v886, %v880
    %v1529 = vpack.c.b16 %v887, %v881
    %v1530 = vpack.c.b16 %v888, %v882
    %v1531 = vpack.c.b16 %v889, %v883
    %v1532 = vpack.c.b16 %v890, %v884
    %v1533 = vpack.c.b16 %v897, %v891
    %v1534 = vpack.c.b16 %v898, %v892
    %v1535 = vpack.c.b16 %v899, %v893
    %v1536 = vpack.c.b16 %v900, %v894
    %v1537 = vpack.c.b16 %v901, %v895
    %v1538 = vpack.c.b16 %v902, %v896
    %v1539 = vpack.c.b16 %v909, %v903
    %v1540 = vpack.c.b16 %v910, %v904
    %v1541 = vpack.c.b16 %v911, %v905
    %v1542 = vpack.c.b16 %v912, %v906
    %v1543 = vpack.c.b16 %v913, %v907
    %v1544 = vpack.c.b16 %v914, %v908
    %v1545 = vpack.c.b16 %v921, %v915
    %v1546 = vpack.c.b16 %v922, %v916
    %v1547 = vpack.c.b16 %v923, %v917
    %v1548 = vpack.c.b16 %v924, %v918
    %v1549 = vpack.c.b16 %v925, %v919
    %v1550 = vpack.c.b16 %v926, %v920
    %v1551 = vpack.c.b16 %v933, %v927
    %v1552 = vpack.c.b16 %v934, %v928
    %v1553 = vpack.c.b16 %v935, %v929
    %v1554 = vpack.c.b16 %v936, %v930
    %v1555 = vpack.c.b16 %v937, %v931
    %v1556 = vpack.c.b16 %v938, %v932
    %v1557 = vpack.c.b16 %v945, %v939
    %v1558 = vpack.c.b16 %v946, %v940
    %v1559 = vpack.c.b16 %v947, %v941
    %v1560 = vpack.c.b16 %v948, %v942
    %v1561 = vpack.c.b16 %v949, %v943
    %v1562 = vpack.c.b16 %v950, %v944
    %v1563 = vpack.c.b16 %v957, %v951
    %v1564 = vpack.c.b16 %v958, %v952
    %v1565 = vpack.c.b16 %v959, %v953
    %v1566 = vpack.c.b16 %v960, %v954
    %v1567 = vpack.c.b16 %v961, %v955
    %v1568 = vpack.c.b16 %v962, %v956
    %v1569 = vpack.c.b16 %v969, %v963
    %v1570 = vpack.c.b16 %v970, %v964
    %v1571 = vpack.c.b16 %v971, %v965
    %v1572 = vpack.c.b16 %v972, %v966
    %v1573 = vpack.c.b16 %v973, %v967
    %v1574 = vpack.c.b16 %v974, %v968
    %v1575 = vpack.c.b16 %v981, %v975
    %v1576 = vpack.c.b16 %v982, %v976
    %v1577 = vpack.c.b16 %v983, %v977
    %v1578 = vpack.c.b16 %v984, %v978
    %v1579 = vpack.c.b16 %v985, %v979
    %v1580 = vpack.c.b16 %v986, %v980
    %v1581 = vpack.c.b16 %v993, %v987
    %v1582 = vpack.c.b16 %v994, %v988
    %v1583 = vpack.c.b16 %v995, %v989
    %v1584 = vpack.c.b16 %v996, %v990
    %v1585 = vpack.c.b16 %v997, %v991
    %v1586 = vpack.c.b16 %v998, %v992
    %v1587 = vpack.c.b16 %v1005, %v999
    %v1588 = vpack.c.b16 %v1006, %v1000
    %v1589 = vpack.c.b16 %v1007, %v1001
    %v1590 = vpack.c.b16 %v1008, %v1002
    %v1591 = vpack.c.b16 %v1009, %v1003
    %v1592 = vpack.c.b16 %v1010, %v1004
    %v1593 = vpack.c.b16 %v1017, %v1011
    %v1594 = vpack.c.b16 %v1018, %v1012
    %v1595 = vpack.c.b16 %v1019, %v1013
    %v1596 = vpack.c.b16 %v1020, %v1014
    %v1597 = vpack.c.b16 %v1021, %v1015
    %v1598 = vpack.c.b16 %v1022, %v1016
    %v1599 = vpack.c.b16 %v1029, %v1023
    %v1600 = vpack.c.b16 %v1030, %v1024
    %v1601 = vpack.c.b16 %v1031, %v1025
    %v1602 = vpack.c.b16 %v1032, %v1026
    %v1603 = vpack.c.b16 %v1033, %v1027
    %v1604 = vpack.c.b16 %v1034, %v1028
    %v1605 = vpack.c.b16 %v1041, %v1035
    %v1606 = vpack.c.b16 %v1042, %v1036
    %v1607 = vpack.c.b16 %v1043, %v1037
    %v1608 = vpack.c.b16 %v1044, %v1038
    %v1609 = vpack.c.b16 %v1045, %v1039
    %v1610 = vpack.c.b16 %v1046, %v1040
    %v1611 = vpack.c.b16 %v1053, %v1047
    %v1612 = vpack.c.b16 %v1054, %v1048
    %v1613 = vpack.c.b16 %v1055, %v1049
    %v1614 = vpack.c.b16 %v1056, %v1050
    %v1615 = vpack.c.b16 %v1057, %v1051
    %v1616 = vpack.c.b16 %v1058, %v1052
    %v1617 = vpack.c.b16 %v1065, %v1059
    %v1618 = vpack.c.b16 %v1066, %v1060
    %v1619 = vpack.c.b16 %v1067, %v1061
    %v1620 = vpack.c.b16 %v1068, %v1062
    %v1621 = vpack.c.b16 %v1069, %v1063
    %v1622 = vpack.c.b16 %v1070, %v1064
    %v1623 = vpack.c.b16 %v1077, %v1071
    %v1624 = vpack.c.b16 %v1078, %v1072
    %v1625 = vpack.c.b16 %v1079, %v1073
    %v1626 = vpack.c.b16 %v1080, %v1074
    %v1627 = vpack.c.b16 %v1081, %v1075
    %v1628 = vpack.c.b16 %v1082, %v1076
    %v1629 = vpack.c.b16 %v1089, %v1083
    %v1630 = vpack.c.b16 %v1090, %v1084
    %v1631 = vpack.c.b16 %v1091, %v1085
    %v1632 = vpack.c.b16 %v1092, %v1086
    %v1633 = vpack.c.b16 %v1093, %v1087
    %v1634 = vpack.c.b16 %v1094, %v1088
    %v1635 = vpack.c.b16 %v1101, %v1095
    %v1636 = vpack.c.b16 %v1102, %v1096
    %v1637 = vpack.c.b16 %v1103, %v1097
    %v1638 = vpack.c.b16 %v1104, %v1098
    %v1639 = vpack.c.b16 %v1105, %v1099
    %v1640 = vpack.c.b16 %v1106, %v1100
    %v1641 = vpack.c.b16 %v1113, %v1107
    %v1642 = vpack.c.b16 %v1114, %v1108
    %v1643 = vpack.c.b16 %v1115, %v1109
    %v1644 = vpack.c.b16 %v1116, %v1110
    %v1645 = vpack.c.b16 %v1117, %v1111
    %v1646 = vpack.c.b16 %v1118, %v1112
    %v1647 = vpack.c.b16 %v1125, %v1119
    %v1648 = vpack.c.b16 %v1126, %v1120
    %v1649 = vpack.c.b16 %v1127, %v1121
    %v1650 = vpack.c.b16 %v1128, %v1122
    %v1651 = vpack.c.b16 %v1129, %v1123
    %v1652 = vpack.c.b16 %v1130, %v1124
    %v1653 = vpack.c.b16 %v1137, %v1131
    %v1654 = vpack.c.b16 %v1138, %v1132
    %v1655 = vpack.c.b16 %v1139, %v1133
    %v1656 = vpack.c.b16 %v1140, %v1134
    %v1657 = vpack.c.b16 %v1141, %v1135
    %v1658 = vpack.c.b16 %v1142, %v1136
    %v1659 = vpack.c.b16 %v1149, %v1143
    %v1660 = vpack.c.b16 %v1150, %v1144
    %v1661 = vpack.c.b16 %v1151, %v1145
    %v1662 = vpack.c.b16 %v1152, %v1146
    %v1663 = vpack.c.b16 %v1153, %v1147
    %v1664 = vpack.c.b16 %v1154, %v1148
    %v1665 = vpack.c.b16 %v1161, %v1155
    %v1666 = vpack.c.b16 %v1162, %v1156
    %v1667 = vpack.c.b16 %v1163, %v1157
    %v1668 = vpack.c.b16 %v1164, %v1158
    %v1669 = vpack.c.b16 %v1165, %v1159
    %v1670 = vpack.c.b16 %v1166, %v1160
    %v1671 = vpack.c.b16 %v1173, %v1167
    %v1672 = vpack.c.b16 %v1174, %v1168
    %v1673 = vpack.c.b16 %v1175, %v1169
    %v1674 = vpack.c.b16 %v1176, %v1170
    %v1675 = vpack.c.b16 %v1177, %v1171
    %v1676 = vpack.c.b16 %v1178, %v1172
    %v1677 = vpack.c.b16 %v1185, %v1179
    %v1678 = vpack.c.b16 %v1186, %v1180
    %v1679 = vpack.c.b16 %v1187, %v1181
    %v1680 = vpack.c.b16 %v1188, %v1182
    %v1681 = vpack.c.b16 %v1189, %v1183
    %v1682 = vpack.c.b16 %v1190, %v1184
    %v1683 = vpack.c.b16 %v1197, %v1191
    %v1684 = vpack.c.b16 %v1198, %v1192
    %v1685 = vpack.c.b16 %v1199, %v1193
    %v1686 = vpack.c.b16 %v1200, %v1194
    %v1687 = vpack.c.b16 %v1201, %v1195
    %v1688 = vpack.c.b16 %v1202, %v1196
    %v1689 = vpack.c.b16 %v1209, %v1203
    %v1690 = vpack.c.b16 %v1210, %v1204
    %v1691 = vpack.c.b16 %v1211, %v1205
    %v1692 = vpack.c.b16 %v1212, %v1206
    %v1693 = vpack.c.b16 %v1213, %v1207
    %v1694 = vpack.c.b16 %v1214, %v1208
    %v1695 = vpack.c.b16 %v1221, %v1215
    %v1696 = vpack.c.b16 %v1222, %v1216
    %v1697 = vpack.c.b16 %v1223, %v1217
    %v1698 = vpack.c.b16 %v1224, %v1218
    %v1699 = vpack.c.b16 %v1225, %v1219
    %v1700 = vpack.c.b16 %v1226, %v1220
    %v1701 = vpack.c.b16 %v1233, %v1227
    %v1702 = vpack.c.b16 %v1234, %v1228
    %v1703 = vpack.c.b16 %v1235, %v1229
    %v1704 = vpack.c.b16 %v1236, %v1230
    %v1705 = vpack.c.b16 %v1237, %v1231
    %v1706 = vpack.c.b16 %v1238, %v1232
    %v1707 = vpack.c.b16 %v1245, %v1239
    %v1708 = vpack.c.b16 %v1246, %v1240
    %v1709 = vpack.c.b16 %v1247, %v1241
    %v1710 = vpack.c.b16 %v1248, %v1242
    %v1711 = vpack.c.b16 %v1249, %v1243
    %v1712 = vpack.c.b16 %v1250, %v1244
    %v1713 = vpack.c.b16 %v1257, %v1251
    %v1714 = vpack.c.b16 %v1258, %v1252
    %v1715 = vpack.c.b16 %v1259, %v1253
    %v1716 = vpack.c.b16 %v1260, %v1254
    %v1717 = vpack.c.b16 %v1261, %v1255
    %v1718 = vpack.c.b16 %v1262, %v1256
    %v1719 = vpack.c.b16 %v1269, %v1263
    %v1720 = vpack.c.b16 %v1270, %v1264
    %v1721 = vpack.c.b16 %v1271, %v1265
    %v1722 = vpack.c.b16 %v1272, %v1266
    %v1723 = vpack.c.b16 %v1273, %v1267
    %v1724 = vpack.c.b16 %v1274, %v1268
    %v1725 = vpack.c.b16 %v1281, %v1275
    %v1726 = vpack.c.b16 %v1282, %v1276
    %v1727 = vpack.c.b16 %v1283, %v1277
    %v1728 = vpack.c.b16 %v1284, %v1278
    %v1729 = vpack.c.b16 %v1285, %v1279
    %v1730 = vpack.c.b16 %v1286, %v1280
    %v1731 = vpack.c.b16 %v1293, %v1287
    %v1732 = vpack.c.b16 %v1294, %v1288
    %v1733 = vpack.c.b16 %v1295, %v1289
    %v1734 = vpack.c.b16 %v1296, %v1290
    %v1735 = vpack.c.b16 %v1297, %v1291
    %v1736 = vpack.c.b16 %v1298, %v1292
    %v1737 = vpack.c.b16 %v1305, %v1299
    %v1738 = vpack.c.b16 %v1306, %v1300
    %v1739 = vpack.c.b16 %v1307, %v1301
    %v1740 = vpack.c.b16 %v1308, %v1302
    %v1741 = vpack.c.b16 %v1309, %v1303
    %v1742 = vpack.c.b16 %v1310, %v1304
    %v1743 = vpack.c.b16 %v1317, %v1311
    %v1744 = vpack.c.b16 %v1318, %v1312
    %v1745 = vpack.c.b16 %v1319, %v1313
    %v1746 = vpack.c.b16 %v1320, %v1314
    %v1747 = vpack.c.b16 %v1321, %v1315
    %v1748 = vpack.c.b16 %v1322, %v1316
    %v1749 = vpack.c.b16 %v1329, %v1323
    %v1750 = vpack.c.b16 %v1330, %v1324
    %v1751 = vpack.c.b16 %v1331, %v1325
    %v1752 = vpack.c.b16 %v1332, %v1326
    %v1753 = vpack.c.b16 %v1333, %v1327
    %v1754 = vpack.c.b16 %v1334, %v1328
    %v1755 = vpack.c.b16 %v1341, %v1335
    %v1756 = vpack.c.b16 %v1342, %v1336
    %v1757 = vpack.c.b16 %v1343, %v1337
    %v1758 = vpack.c.b16 %v1344, %v1338
    %v1759 = vpack.c.b16 %v1345, %v1339
    %v1760 = vpack.c.b16 %v1346, %v1340
    %v1761 = vpack.c.b16 %v1353, %v1347
    %v1762 = vpack.c.b16 %v1354, %v1348
    %v1763 = vpack.c.b16 %v1355, %v1349
    %v1764 = vpack.c.b16 %v1356, %v1350
    %v1765 = vpack.c.b16 %v1357, %v1351
    %v1766 = vpack.c.b16 %v1358, %v1352
    %v1767 = vpack.c.b16 %v1365, %v1359
    %v1768 = vpack.c.b16 %v1366, %v1360
    %v1769 = vpack.c.b16 %v1367, %v1361
    %v1770 = vpack.c.b16 %v1368, %v1362
    %v1771 = vpack.c.b16 %v1369, %v1363
    %v1772 = vpack.c.b16 %v1370, %v1364
    %v1773 = vpack.c.b16 %v1377, %v1371
    %v1774 = vpack.c.b16 %v1378, %v1372
    %v1775 = vpack.c.b16 %v1379, %v1373
    %v1776 = vpack.c.b16 %v1380, %v1374
    %v1777 = vpack.c.b16 %v1381, %v1375
    %v1778 = vpack.c.b16 %v1382, %v1376
    %v1779 = vpack.c.b16 %v1389, %v1383
    %v1780 = vpack.c.b16 %v1390, %v1384
    %v1781 = vpack.c.b16 %v1391, %v1385
    %v1782 = vpack.c.b16 %v1392, %v1386
    %v1783 = vpack.c.b16 %v1393, %v1387
    %v1784 = vpack.c.b16 %v1394, %v1388
    %v1785 = vpack.c.b16 %v1401, %v1395
    %v1786 = vpack.c.b16 %v1402, %v1396
    %v1787 = vpack.c.b16 %v1403, %v1397
    %v1788 = vpack.c.b16 %v1404, %v1398
    %v1789 = vpack.c.b16 %v1405, %v1399
    %v1790 = vpack.c.b16 %v1406, %v1400
    %v1791 = vpack.c.b16 %v1413, %v1407
    %v1792 = vpack.c.b16 %v1414, %v1408
    %v1793 = vpack.c.b16 %v1415, %v1409
    %v1794 = vpack.c.b16 %v1416, %v1410
    %v1795 = vpack.c.b16 %v1417, %v1411
    %v1796 = vpack.c.b16 %v1418, %v1412
    %v1797 = vpack.c.b16 %v1425, %v1419
    %v1798 = vpack.c.b16 %v1426, %v1420
    %v1799 = vpack.c.b16 %v1427, %v1421
    %v1800 = vpack.c.b16 %v1428, %v1422
    %v1801 = vpack.c.b16 %v1429, %v1423
    %v1802 = vpack.c.b16 %v1430, %v1424
    %v1803 = vpack.c.b16 %v1437, %v1431
    %v1804 = vpack.c.b16 %v1438, %v1432
    %v1805 = vpack.c.b16 %v1439, %v1433
    %v1806 = vpack.c.b16 %v1440, %v1434
    %v1807 = vpack.c.b16 %v1441, %v1435
    %v1808 = vpack.c.b16 %v1442, %v1436
    %v1809 = vpack.c.b16 %v1449, %v1443
    %v1810 = vpack.c.b16 %v1450, %v1444
    %v1811 = vpack.c.b16 %v1451, %v1445
    %v1812 = vpack.c.b16 %v1452, %v1446
    %v1813 = vpack.c.b16 %v1453, %v1447
    %v1814 = vpack.c.b16 %v1454, %v1448
    %v1815 = vpack.c.b16 %v1461, %v1455
    %v1816 = vpack.c.b16 %v1462, %v1456
    %v1817 = vpack.c.b16 %v1463, %v1457
    %v1818 = vpack.c.b16 %v1464, %v1458
    %v1819 = vpack.c.b16 %v1465, %v1459
    %v1820 = vpack.c.b16 %v1466, %v1460
    %v1821 = vpack.c.b16 %v1473, %v1467
    %v1822 = vpack.c.b16 %v1474, %v1468
    %v1823 = vpack.c.b16 %v1475, %v1469
    %v1824 = vpack.c.b16 %v1476, %v1470
    %v1825 = vpack.c.b16 %v1477, %v1471
    %v1826 = vpack.c.b16 %v1478, %v1472
    %v1827 = vpack.c.b16 %v1485, %v1479
    %v1828 = vpack.c.b16 %v1486, %v1480
    %v1829 = vpack.c.b16 %v1487, %v1481
    %v1830 = vpack.c.b16 %v1488, %v1482
    %v1831 = vpack.c.b16 %v1489, %v1483
    %v1832 = vpack.c.b16 %v1490, %v1484
    %v1833 = vpack.c.b16 %v1497, %v1491
    %v1834 = vpack.c.b16 %v1498, %v1492
    %v1835 = vpack.c.b16 %v1499, %v1493
    %v1836 = vpack.c.b16 %v1500, %v1494
    %v1837 = vpack.c.b16 %v1501, %v1495
    %v1838 = vpack.c.b16 %v1502, %v1496
    %2175 = vmatpush.bf16.msra.mxu0 %v1545
    %2176 = vmatpush.bf16.msra.mxu0 %v1539
    %2177 = vmatpush.bf16.msra.mxu0 %v1533
    %2178 = vmatpush.bf16.msra.mxu0 %v1527
    %2179 = vmatpush.bf16.msra.mxu0 %v1521
    %2180 = vmatpush.bf16.msra.mxu0 %v1515
    %2181 = vmatpush.bf16.msra.mxu0 %v1509
    %2182 = vmatpush.bf16.msra.mxu0 %v1503
    %2183 = vmatmul.bf16.gmra.mxu0 %v481
    %v2184 = vpop.f32.mrf.mxu0
    %v2185 = vadd.f32 %v458, %v2184
    %v2186 = vpop.f32.mrf.mxu0
    %2187 = vdwg.mxu0
    %2188 = vmatpush.bf16.msra.mxu0 %v1593
    %2189 = vmatpush.bf16.msra.mxu0 %v1587
    %2190 = vmatpush.bf16.msra.mxu0 %v1581
    %2191 = vmatpush.bf16.msra.mxu0 %v1575
    %2192 = vmatpush.bf16.msra.mxu0 %v1569
    %2193 = vmatpush.bf16.msra.mxu0 %v1563
    %2194 = vmatpush.bf16.msra.mxu0 %v1557
    %2195 = vmatpush.bf16.msra.mxu0 %v1551
    %2196 = vmatmul.bf16.gmra.mxu0 %v482
    %v2197 = vpop.f32.mrf.mxu0
    %v2198 = vadd.f32 %v2185, %v2197
    %v2199 = vpop.f32.mrf.mxu0
    %2200 = vdwg.mxu0
    %2201 = vmatpush.bf16.msra.mxu0 %v1641
    %2202 = vmatpush.bf16.msra.mxu0 %v1635
    %2203 = vmatpush.bf16.msra.mxu0 %v1629
    %2204 = vmatpush.bf16.msra.mxu0 %v1623
    %2205 = vmatpush.bf16.msra.mxu0 %v1617
    %2206 = vmatpush.bf16.msra.mxu0 %v1611
    %2207 = vmatpush.bf16.msra.mxu0 %v1605
    %2208 = vmatpush.bf16.msra.mxu0 %v1599
    %2209 = vmatmul.bf16.gmra.mxu0 %v483
    %v2210 = vpop.f32.mrf.mxu0
    %v2211 = vadd.f32 %v2198, %v2210
    %v2212 = vpop.f32.mrf.mxu0
    %2213 = vdwg.mxu0
    %2214 = vmatpush.bf16.msra.mxu0 %v1689
    %2215 = vmatpush.bf16.msra.mxu0 %v1683
    %2216 = vmatpush.bf16.msra.mxu0 %v1677
    %2217 = vmatpush.bf16.msra.mxu0 %v1671
    %2218 = vmatpush.bf16.msra.mxu0 %v1665
    %2219 = vmatpush.bf16.msra.mxu0 %v1659
    %2220 = vmatpush.bf16.msra.mxu0 %v1653
    %2221 = vmatpush.bf16.msra.mxu0 %v1647
    %2222 = vmatmul.bf16.gmra.mxu0 %v484
    %v2223 = vpop.f32.mrf.mxu0
    %v2224 = vadd.f32 %v2211, %v2223
    %v2225 = vpop.f32.mrf.mxu0
    %2226 = vdwg.mxu0
    %2227 = vmatpush.bf16.msra.mxu0 %v1737
    %2228 = vmatpush.bf16.msra.mxu0 %v1731
    %2229 = vmatpush.bf16.msra.mxu0 %v1725
    %2230 = vmatpush.bf16.msra.mxu0 %v1719
    %2231 = vmatpush.bf16.msra.mxu0 %v1713
    %2232 = vmatpush.bf16.msra.mxu0 %v1707
    %2233 = vmatpush.bf16.msra.mxu0 %v1701
    %2234 = vmatpush.bf16.msra.mxu0 %v1695
    %2235 = vmatmul.bf16.gmra.mxu0 %v485
    %v2236 = vpop.f32.mrf.mxu0
    %v2237 = vadd.f32 %v2224, %v2236
    %v2238 = vpop.f32.mrf.mxu0
    %2239 = vdwg.mxu0
    %2240 = vmatpush.bf16.msra.mxu0 %v1785
    %2241 = vmatpush.bf16.msra.mxu0 %v1779
    %2242 = vmatpush.bf16.msra.mxu0 %v1773
    %2243 = vmatpush.bf16.msra.mxu0 %v1767
    %2244 = vmatpush.bf16.msra.mxu0 %v1761
    %2245 = vmatpush.bf16.msra.mxu0 %v1755
    %2246 = vmatpush.bf16.msra.mxu0 %v1749
    %2247 = vmatpush.bf16.msra.mxu0 %v1743
    %2248 = vmatmul.bf16.gmra.mxu0 %v486
    %v2249 = vpop.f32.mrf.mxu0
    %v2250 = vadd.f32 %v2237, %v2249
    %v2251 = vpop.f32.mrf.mxu0
    %2252 = vdwg.mxu0
    %2253 = vmatpush.bf16.msra.mxu0 %v1833
    %2254 = vmatpush.bf16.msra.mxu0 %v1827
    %2255 = vmatpush.bf16.msra.mxu0 %v1821
    %2256 = vmatpush.bf16.msra.mxu0 %v1815
    %2257 = vmatpush.bf16.msra.mxu0 %v1809
    %2258 = vmatpush.bf16.msra.mxu0 %v1803
    %2259 = vmatpush.bf16.msra.mxu0 %v1797
    %2260 = vmatpush.bf16.msra.mxu0 %v1791
    %2261 = vmatmul.bf16.gmra.mxu0 %v487
    %v2262 = vpop.f32.mrf.mxu0
    %v2263 = vadd.f32 %v2250, %v2262
    %v2264 = vpop.f32.mrf.mxu0
    %2265 = vdwg.mxu0
    %2266 = vmatpush.bf16.msra.mxu0 %v1546
    %2267 = vmatpush.bf16.msra.mxu0 %v1540
    %2268 = vmatpush.bf16.msra.mxu0 %v1534
    %2269 = vmatpush.bf16.msra.mxu0 %v1528
    %2270 = vmatpush.bf16.msra.mxu0 %v1522
    %2271 = vmatpush.bf16.msra.mxu0 %v1516
    %2272 = vmatpush.bf16.msra.mxu0 %v1510
    %2273 = vmatpush.bf16.msra.mxu0 %v1504
    %2274 = vmatmul.bf16.gmra.mxu0 %v481
    %v2275 = vpop.f32.mrf.mxu0
    %v2276 = vadd.f32 %v459, %v2275
    %v2277 = vpop.f32.mrf.mxu0
    %2278 = vdwg.mxu0
    %2279 = vmatpush.bf16.msra.mxu0 %v1594
    %2280 = vmatpush.bf16.msra.mxu0 %v1588
    %2281 = vmatpush.bf16.msra.mxu0 %v1582
    %2282 = vmatpush.bf16.msra.mxu0 %v1576
    %2283 = vmatpush.bf16.msra.mxu0 %v1570
    %2284 = vmatpush.bf16.msra.mxu0 %v1564
    %2285 = vmatpush.bf16.msra.mxu0 %v1558
    %2286 = vmatpush.bf16.msra.mxu0 %v1552
    %2287 = vmatmul.bf16.gmra.mxu0 %v482
    %v2288 = vpop.f32.mrf.mxu0
    %v2289 = vadd.f32 %v2276, %v2288
    %v2290 = vpop.f32.mrf.mxu0
    %2291 = vdwg.mxu0
    %2292 = vmatpush.bf16.msra.mxu0 %v1642
    %2293 = vmatpush.bf16.msra.mxu0 %v1636
    %2294 = vmatpush.bf16.msra.mxu0 %v1630
    %2295 = vmatpush.bf16.msra.mxu0 %v1624
    %2296 = vmatpush.bf16.msra.mxu0 %v1618
    %2297 = vmatpush.bf16.msra.mxu0 %v1612
    %2298 = vmatpush.bf16.msra.mxu0 %v1606
    %2299 = vmatpush.bf16.msra.mxu0 %v1600
    %2300 = vmatmul.bf16.gmra.mxu0 %v483
    %v2301 = vpop.f32.mrf.mxu0
    %v2302 = vadd.f32 %v2289, %v2301
    %v2303 = vpop.f32.mrf.mxu0
    %2304 = vdwg.mxu0
    %2305 = vmatpush.bf16.msra.mxu0 %v1690
    %2306 = vmatpush.bf16.msra.mxu0 %v1684
    %2307 = vmatpush.bf16.msra.mxu0 %v1678
    %2308 = vmatpush.bf16.msra.mxu0 %v1672
    %2309 = vmatpush.bf16.msra.mxu0 %v1666
    %2310 = vmatpush.bf16.msra.mxu0 %v1660
    %2311 = vmatpush.bf16.msra.mxu0 %v1654
    %2312 = vmatpush.bf16.msra.mxu0 %v1648
    %2313 = vmatmul.bf16.gmra.mxu0 %v484
    %v2314 = vpop.f32.mrf.mxu0
    %v2315 = vadd.f32 %v2302, %v2314
    %v2316 = vpop.f32.mrf.mxu0
    %2317 = vdwg.mxu0
    %2318 = vmatpush.bf16.msra.mxu0 %v1738
    %2319 = vmatpush.bf16.msra.mxu0 %v1732
    %2320 = vmatpush.bf16.msra.mxu0 %v1726
    %2321 = vmatpush.bf16.msra.mxu0 %v1720
    %2322 = vmatpush.bf16.msra.mxu0 %v1714
    %2323 = vmatpush.bf16.msra.mxu0 %v1708
    %2324 = vmatpush.bf16.msra.mxu0 %v1702
    %2325 = vmatpush.bf16.msra.mxu0 %v1696
    %2326 = vmatmul.bf16.gmra.mxu0 %v485
    %v2327 = vpop.f32.mrf.mxu0
    %v2328 = vadd.f32 %v2315, %v2327
    %v2329 = vpop.f32.mrf.mxu0
    %2330 = vdwg.mxu0
    %2331 = vmatpush.bf16.msra.mxu0 %v1786
    %2332 = vmatpush.bf16.msra.mxu0 %v1780
    %2333 = vmatpush.bf16.msra.mxu0 %v1774
    %2334 = vmatpush.bf16.msra.mxu0 %v1768
    %2335 = vmatpush.bf16.msra.mxu0 %v1762
    %2336 = vmatpush.bf16.msra.mxu0 %v1756
    %2337 = vmatpush.bf16.msra.mxu0 %v1750
    %2338 = vmatpush.bf16.msra.mxu0 %v1744
    %2339 = vmatmul.bf16.gmra.mxu0 %v486
    %v2340 = vpop.f32.mrf.mxu0
    %v2341 = vadd.f32 %v2328, %v2340
    %v2342 = vpop.f32.mrf.mxu0
    %2343 = vdwg.mxu0
    %2344 = vmatpush.bf16.msra.mxu0 %v1834
    %2345 = vmatpush.bf16.msra.mxu0 %v1828
    %2346 = vmatpush.bf16.msra.mxu0 %v1822
    %2347 = vmatpush.bf16.msra.mxu0 %v1816
    %2348 = vmatpush.bf16.msra.mxu0 %v1810
    %2349 = vmatpush.bf16.msra.mxu0 %v1804
    %2350 = vmatpush.bf16.msra.mxu0 %v1798
    %2351 = vmatpush.bf16.msra.mxu0 %v1792
    %2352 = vmatmul.bf16.gmra.mxu0 %v487
    %v2353 = vpop.f32.mrf.mxu0
    %v2354 = vadd.f32 %v2341, %v2353
    %v2355 = vpop.f32.mrf.mxu0
    %2356 = vdwg.mxu0
    %2357 = vmatpush.bf16.msra.mxu0 %v1547
    %2358 = vmatpush.bf16.msra.mxu0 %v1541
    %2359 = vmatpush.bf16.msra.mxu0 %v1535
    %2360 = vmatpush.bf16.msra.mxu0 %v1529
    %2361 = vmatpush.bf16.msra.mxu0 %v1523
    %2362 = vmatpush.bf16.msra.mxu0 %v1517
    %2363 = vmatpush.bf16.msra.mxu0 %v1511
    %2364 = vmatpush.bf16.msra.mxu0 %v1505
    %2365 = vmatmul.bf16.gmra.mxu0 %v481
    %v2366 = vpop.f32.mrf.mxu0
    %v2367 = vadd.f32 %v460, %v2366
    %v2368 = vpop.f32.mrf.mxu0
    %2369 = vdwg.mxu0
    %2370 = vmatpush.bf16.msra.mxu0 %v1595
    %2371 = vmatpush.bf16.msra.mxu0 %v1589
    %2372 = vmatpush.bf16.msra.mxu0 %v1583
    %2373 = vmatpush.bf16.msra.mxu0 %v1577
    %2374 = vmatpush.bf16.msra.mxu0 %v1571
    %2375 = vmatpush.bf16.msra.mxu0 %v1565
    %2376 = vmatpush.bf16.msra.mxu0 %v1559
    %2377 = vmatpush.bf16.msra.mxu0 %v1553
    %2378 = vmatmul.bf16.gmra.mxu0 %v482
    %v2379 = vpop.f32.mrf.mxu0
    %v2380 = vadd.f32 %v2367, %v2379
    %v2381 = vpop.f32.mrf.mxu0
    %2382 = vdwg.mxu0
    %2383 = vmatpush.bf16.msra.mxu0 %v1643
    %2384 = vmatpush.bf16.msra.mxu0 %v1637
    %2385 = vmatpush.bf16.msra.mxu0 %v1631
    %2386 = vmatpush.bf16.msra.mxu0 %v1625
    %2387 = vmatpush.bf16.msra.mxu0 %v1619
    %2388 = vmatpush.bf16.msra.mxu0 %v1613
    %2389 = vmatpush.bf16.msra.mxu0 %v1607
    %2390 = vmatpush.bf16.msra.mxu0 %v1601
    %2391 = vmatmul.bf16.gmra.mxu0 %v483
    %v2392 = vpop.f32.mrf.mxu0
    %v2393 = vadd.f32 %v2380, %v2392
    %v2394 = vpop.f32.mrf.mxu0
    %2395 = vdwg.mxu0
    %2396 = vmatpush.bf16.msra.mxu0 %v1691
    %2397 = vmatpush.bf16.msra.mxu0 %v1685
    %2398 = vmatpush.bf16.msra.mxu0 %v1679
    %2399 = vmatpush.bf16.msra.mxu0 %v1673
    %2400 = vmatpush.bf16.msra.mxu0 %v1667
    %2401 = vmatpush.bf16.msra.mxu0 %v1661
    %2402 = vmatpush.bf16.msra.mxu0 %v1655
    %2403 = vmatpush.bf16.msra.mxu0 %v1649
    %2404 = vmatmul.bf16.gmra.mxu0 %v484
    %v2405 = vpop.f32.mrf.mxu0
    %v2406 = vadd.f32 %v2393, %v2405
    %v2407 = vpop.f32.mrf.mxu0
    %2408 = vdwg.mxu0
    %2409 = vmatpush.bf16.msra.mxu0 %v1739
    %2410 = vmatpush.bf16.msra.mxu0 %v1733
    %2411 = vmatpush.bf16.msra.mxu0 %v1727
    %2412 = vmatpush.bf16.msra.mxu0 %v1721
    %2413 = vmatpush.bf16.msra.mxu0 %v1715
    %2414 = vmatpush.bf16.msra.mxu0 %v1709
    %2415 = vmatpush.bf16.msra.mxu0 %v1703
    %2416 = vmatpush.bf16.msra.mxu0 %v1697
    %2417 = vmatmul.bf16.gmra.mxu0 %v485
    %v2418 = vpop.f32.mrf.mxu0
    %v2419 = vadd.f32 %v2406, %v2418
    %v2420 = vpop.f32.mrf.mxu0
    %2421 = vdwg.mxu0
    %2422 = vmatpush.bf16.msra.mxu0 %v1787
    %2423 = vmatpush.bf16.msra.mxu0 %v1781
    %2424 = vmatpush.bf16.msra.mxu0 %v1775
    %2425 = vmatpush.bf16.msra.mxu0 %v1769
    %2426 = vmatpush.bf16.msra.mxu0 %v1763
    %2427 = vmatpush.bf16.msra.mxu0 %v1757
    %2428 = vmatpush.bf16.msra.mxu0 %v1751
    %2429 = vmatpush.bf16.msra.mxu0 %v1745
    %2430 = vmatmul.bf16.gmra.mxu0 %v486
    %v2431 = vpop.f32.mrf.mxu0
    %v2432 = vadd.f32 %v2419, %v2431
    %v2433 = vpop.f32.mrf.mxu0
    %2434 = vdwg.mxu0
    %2435 = vmatpush.bf16.msra.mxu0 %v1835
    %2436 = vmatpush.bf16.msra.mxu0 %v1829
    %2437 = vmatpush.bf16.msra.mxu0 %v1823
    %2438 = vmatpush.bf16.msra.mxu0 %v1817
    %2439 = vmatpush.bf16.msra.mxu0 %v1811
    %2440 = vmatpush.bf16.msra.mxu0 %v1805
    %2441 = vmatpush.bf16.msra.mxu0 %v1799
    %2442 = vmatpush.bf16.msra.mxu0 %v1793
    %2443 = vmatmul.bf16.gmra.mxu0 %v487
    %v2444 = vpop.f32.mrf.mxu0
    %v2445 = vadd.f32 %v2432, %v2444
    %v2446 = vpop.f32.mrf.mxu0
    %2447 = vdwg.mxu0
    %2448 = vmatpush.bf16.msra.mxu0 %v1548
    %2449 = vmatpush.bf16.msra.mxu0 %v1542
    %2450 = vmatpush.bf16.msra.mxu0 %v1536
    %2451 = vmatpush.bf16.msra.mxu0 %v1530
    %2452 = vmatpush.bf16.msra.mxu0 %v1524
    %2453 = vmatpush.bf16.msra.mxu0 %v1518
    %2454 = vmatpush.bf16.msra.mxu0 %v1512
    %2455 = vmatpush.bf16.msra.mxu0 %v1506
    %2456 = vmatmul.bf16.gmra.mxu0 %v481
    %v2457 = vpop.f32.mrf.mxu0
    %v2458 = vadd.f32 %v461, %v2457
    %v2459 = vpop.f32.mrf.mxu0
    %2460 = vdwg.mxu0
    %2461 = vmatpush.bf16.msra.mxu0 %v1596
    %2462 = vmatpush.bf16.msra.mxu0 %v1590
    %2463 = vmatpush.bf16.msra.mxu0 %v1584
    %2464 = vmatpush.bf16.msra.mxu0 %v1578
    %2465 = vmatpush.bf16.msra.mxu0 %v1572
    %2466 = vmatpush.bf16.msra.mxu0 %v1566
    %2467 = vmatpush.bf16.msra.mxu0 %v1560
    %2468 = vmatpush.bf16.msra.mxu0 %v1554
    %2469 = vmatmul.bf16.gmra.mxu0 %v482
    %v2470 = vpop.f32.mrf.mxu0
    %v2471 = vadd.f32 %v2458, %v2470
    %v2472 = vpop.f32.mrf.mxu0
    %2473 = vdwg.mxu0
    %2474 = vmatpush.bf16.msra.mxu0 %v1644
    %2475 = vmatpush.bf16.msra.mxu0 %v1638
    %2476 = vmatpush.bf16.msra.mxu0 %v1632
    %2477 = vmatpush.bf16.msra.mxu0 %v1626
    %2478 = vmatpush.bf16.msra.mxu0 %v1620
    %2479 = vmatpush.bf16.msra.mxu0 %v1614
    %2480 = vmatpush.bf16.msra.mxu0 %v1608
    %2481 = vmatpush.bf16.msra.mxu0 %v1602
    %2482 = vmatmul.bf16.gmra.mxu0 %v483
    %v2483 = vpop.f32.mrf.mxu0
    %v2484 = vadd.f32 %v2471, %v2483
    %v2485 = vpop.f32.mrf.mxu0
    %2486 = vdwg.mxu0
    %2487 = vmatpush.bf16.msra.mxu0 %v1692
    %2488 = vmatpush.bf16.msra.mxu0 %v1686
    %2489 = vmatpush.bf16.msra.mxu0 %v1680
    %2490 = vmatpush.bf16.msra.mxu0 %v1674
    %2491 = vmatpush.bf16.msra.mxu0 %v1668
    %2492 = vmatpush.bf16.msra.mxu0 %v1662
    %2493 = vmatpush.bf16.msra.mxu0 %v1656
    %2494 = vmatpush.bf16.msra.mxu0 %v1650
    %2495 = vmatmul.bf16.gmra.mxu0 %v484
    %v2496 = vpop.f32.mrf.mxu0
    %v2497 = vadd.f32 %v2484, %v2496
    %v2498 = vpop.f32.mrf.mxu0
    %2499 = vdwg.mxu0
    %2500 = vmatpush.bf16.msra.mxu0 %v1740
    %2501 = vmatpush.bf16.msra.mxu0 %v1734
    %2502 = vmatpush.bf16.msra.mxu0 %v1728
    %2503 = vmatpush.bf16.msra.mxu0 %v1722
    %2504 = vmatpush.bf16.msra.mxu0 %v1716
    %2505 = vmatpush.bf16.msra.mxu0 %v1710
    %2506 = vmatpush.bf16.msra.mxu0 %v1704
    %2507 = vmatpush.bf16.msra.mxu0 %v1698
    %2508 = vmatmul.bf16.gmra.mxu0 %v485
    %v2509 = vpop.f32.mrf.mxu0
    %v2510 = vadd.f32 %v2497, %v2509
    %v2511 = vpop.f32.mrf.mxu0
    %2512 = vdwg.mxu0
    %2513 = vmatpush.bf16.msra.mxu0 %v1788
    %2514 = vmatpush.bf16.msra.mxu0 %v1782
    %2515 = vmatpush.bf16.msra.mxu0 %v1776
    %2516 = vmatpush.bf16.msra.mxu0 %v1770
    %2517 = vmatpush.bf16.msra.mxu0 %v1764
    %2518 = vmatpush.bf16.msra.mxu0 %v1758
    %2519 = vmatpush.bf16.msra.mxu0 %v1752
    %2520 = vmatpush.bf16.msra.mxu0 %v1746
    %2521 = vmatmul.bf16.gmra.mxu0 %v486
    %v2522 = vpop.f32.mrf.mxu0
    %v2523 = vadd.f32 %v2510, %v2522
    %v2524 = vpop.f32.mrf.mxu0
    %2525 = vdwg.mxu0
    %2526 = vmatpush.bf16.msra.mxu0 %v1836
    %2527 = vmatpush.bf16.msra.mxu0 %v1830
    %2528 = vmatpush.bf16.msra.mxu0 %v1824
    %2529 = vmatpush.bf16.msra.mxu0 %v1818
    %2530 = vmatpush.bf16.msra.mxu0 %v1812
    %2531 = vmatpush.bf16.msra.mxu0 %v1806
    %2532 = vmatpush.bf16.msra.mxu0 %v1800
    %2533 = vmatpush.bf16.msra.mxu0 %v1794
    %2534 = vmatmul.bf16.gmra.mxu0 %v487
    %v2535 = vpop.f32.mrf.mxu0
    %v2536 = vadd.f32 %v2523, %v2535
    %v2537 = vpop.f32.mrf.mxu0
    %2538 = vdwg.mxu0
    %2539 = vmatpush.bf16.msra.mxu0 %v1549
    %2540 = vmatpush.bf16.msra.mxu0 %v1543
    %2541 = vmatpush.bf16.msra.mxu0 %v1537
    %2542 = vmatpush.bf16.msra.mxu0 %v1531
    %2543 = vmatpush.bf16.msra.mxu0 %v1525
    %2544 = vmatpush.bf16.msra.mxu0 %v1519
    %2545 = vmatpush.bf16.msra.mxu0 %v1513
    %2546 = vmatpush.bf16.msra.mxu0 %v1507
    %2547 = vmatmul.bf16.gmra.mxu0 %v481
    %v2548 = vpop.f32.mrf.mxu0
    %v2549 = vadd.f32 %v462, %v2548
    %v2550 = vpop.f32.mrf.mxu0
    %2551 = vdwg.mxu0
    %2552 = vmatpush.bf16.msra.mxu0 %v1597
    %2553 = vmatpush.bf16.msra.mxu0 %v1591
    %2554 = vmatpush.bf16.msra.mxu0 %v1585
    %2555 = vmatpush.bf16.msra.mxu0 %v1579
    %2556 = vmatpush.bf16.msra.mxu0 %v1573
    %2557 = vmatpush.bf16.msra.mxu0 %v1567
    %2558 = vmatpush.bf16.msra.mxu0 %v1561
    %2559 = vmatpush.bf16.msra.mxu0 %v1555
    %2560 = vmatmul.bf16.gmra.mxu0 %v482
    %v2561 = vpop.f32.mrf.mxu0
    %v2562 = vadd.f32 %v2549, %v2561
    %v2563 = vpop.f32.mrf.mxu0
    %2564 = vdwg.mxu0
    %2565 = vmatpush.bf16.msra.mxu0 %v1645
    %2566 = vmatpush.bf16.msra.mxu0 %v1639
    %2567 = vmatpush.bf16.msra.mxu0 %v1633
    %2568 = vmatpush.bf16.msra.mxu0 %v1627
    %2569 = vmatpush.bf16.msra.mxu0 %v1621
    %2570 = vmatpush.bf16.msra.mxu0 %v1615
    %2571 = vmatpush.bf16.msra.mxu0 %v1609
    %2572 = vmatpush.bf16.msra.mxu0 %v1603
    %2573 = vmatmul.bf16.gmra.mxu0 %v483
    %v2574 = vpop.f32.mrf.mxu0
    %v2575 = vadd.f32 %v2562, %v2574
    %v2576 = vpop.f32.mrf.mxu0
    %2577 = vdwg.mxu0
    %2578 = vmatpush.bf16.msra.mxu0 %v1693
    %2579 = vmatpush.bf16.msra.mxu0 %v1687
    %2580 = vmatpush.bf16.msra.mxu0 %v1681
    %2581 = vmatpush.bf16.msra.mxu0 %v1675
    %2582 = vmatpush.bf16.msra.mxu0 %v1669
    %2583 = vmatpush.bf16.msra.mxu0 %v1663
    %2584 = vmatpush.bf16.msra.mxu0 %v1657
    %2585 = vmatpush.bf16.msra.mxu0 %v1651
    %2586 = vmatmul.bf16.gmra.mxu0 %v484
    %v2587 = vpop.f32.mrf.mxu0
    %v2588 = vadd.f32 %v2575, %v2587
    %v2589 = vpop.f32.mrf.mxu0
    %2590 = vdwg.mxu0
    %2591 = vmatpush.bf16.msra.mxu0 %v1741
    %2592 = vmatpush.bf16.msra.mxu0 %v1735
    %2593 = vmatpush.bf16.msra.mxu0 %v1729
    %2594 = vmatpush.bf16.msra.mxu0 %v1723
    %2595 = vmatpush.bf16.msra.mxu0 %v1717
    %2596 = vmatpush.bf16.msra.mxu0 %v1711
    %2597 = vmatpush.bf16.msra.mxu0 %v1705
    %2598 = vmatpush.bf16.msra.mxu0 %v1699
    %2599 = vmatmul.bf16.gmra.mxu0 %v485
    %v2600 = vpop.f32.mrf.mxu0
    %v2601 = vadd.f32 %v2588, %v2600
    %v2602 = vpop.f32.mrf.mxu0
    %2603 = vdwg.mxu0
    %2604 = vmatpush.bf16.msra.mxu0 %v1789
    %2605 = vmatpush.bf16.msra.mxu0 %v1783
    %2606 = vmatpush.bf16.msra.mxu0 %v1777
    %2607 = vmatpush.bf16.msra.mxu0 %v1771
    %2608 = vmatpush.bf16.msra.mxu0 %v1765
    %2609 = vmatpush.bf16.msra.mxu0 %v1759
    %2610 = vmatpush.bf16.msra.mxu0 %v1753
    %2611 = vmatpush.bf16.msra.mxu0 %v1747
    %2612 = vmatmul.bf16.gmra.mxu0 %v486
    %v2613 = vpop.f32.mrf.mxu0
    %v2614 = vadd.f32 %v2601, %v2613
    %v2615 = vpop.f32.mrf.mxu0
    %2616 = vdwg.mxu0
    %2617 = vmatpush.bf16.msra.mxu0 %v1837
    %2618 = vmatpush.bf16.msra.mxu0 %v1831
    %2619 = vmatpush.bf16.msra.mxu0 %v1825
    %2620 = vmatpush.bf16.msra.mxu0 %v1819
    %2621 = vmatpush.bf16.msra.mxu0 %v1813
    %2622 = vmatpush.bf16.msra.mxu0 %v1807
    %2623 = vmatpush.bf16.msra.mxu0 %v1801
    %2624 = vmatpush.bf16.msra.mxu0 %v1795
    %2625 = vmatmul.bf16.gmra.mxu0 %v487
    %v2626 = vpop.f32.mrf.mxu0
    %v2627 = vadd.f32 %v2614, %v2626
    %v2628 = vpop.f32.mrf.mxu0
    %2629 = vdwg.mxu0
    %2630 = vmatpush.bf16.msra.mxu0 %v1550
    %2631 = vmatpush.bf16.msra.mxu0 %v1544
    %2632 = vmatpush.bf16.msra.mxu0 %v1538
    %2633 = vmatpush.bf16.msra.mxu0 %v1532
    %2634 = vmatpush.bf16.msra.mxu0 %v1526
    %2635 = vmatpush.bf16.msra.mxu0 %v1520
    %2636 = vmatpush.bf16.msra.mxu0 %v1514
    %2637 = vmatpush.bf16.msra.mxu0 %v1508
    %2638 = vmatmul.bf16.gmra.mxu0 %v481
    %v2639 = vpop.f32.mrf.mxu0
    %v2640 = vadd.f32 %v463, %v2639
    %v2641 = vpop.f32.mrf.mxu0
    %2642 = vdwg.mxu0
    %2643 = vmatpush.bf16.msra.mxu0 %v1598
    %2644 = vmatpush.bf16.msra.mxu0 %v1592
    %2645 = vmatpush.bf16.msra.mxu0 %v1586
    %2646 = vmatpush.bf16.msra.mxu0 %v1580
    %2647 = vmatpush.bf16.msra.mxu0 %v1574
    %2648 = vmatpush.bf16.msra.mxu0 %v1568
    %2649 = vmatpush.bf16.msra.mxu0 %v1562
    %2650 = vmatpush.bf16.msra.mxu0 %v1556
    %2651 = vmatmul.bf16.gmra.mxu0 %v482
    %v2652 = vpop.f32.mrf.mxu0
    %v2653 = vadd.f32 %v2640, %v2652
    %v2654 = vpop.f32.mrf.mxu0
    %2655 = vdwg.mxu0
    %2656 = vmatpush.bf16.msra.mxu0 %v1646
    %2657 = vmatpush.bf16.msra.mxu0 %v1640
    %2658 = vmatpush.bf16.msra.mxu0 %v1634
    %2659 = vmatpush.bf16.msra.mxu0 %v1628
    %2660 = vmatpush.bf16.msra.mxu0 %v1622
    %2661 = vmatpush.bf16.msra.mxu0 %v1616
    %2662 = vmatpush.bf16.msra.mxu0 %v1610
    %2663 = vmatpush.bf16.msra.mxu0 %v1604
    %2664 = vmatmul.bf16.gmra.mxu0 %v483
    %v2665 = vpop.f32.mrf.mxu0
    %v2666 = vadd.f32 %v2653, %v2665
    %v2667 = vpop.f32.mrf.mxu0
    %2668 = vdwg.mxu0
    %2669 = vmatpush.bf16.msra.mxu0 %v1694
    %2670 = vmatpush.bf16.msra.mxu0 %v1688
    %2671 = vmatpush.bf16.msra.mxu0 %v1682
    %2672 = vmatpush.bf16.msra.mxu0 %v1676
    %2673 = vmatpush.bf16.msra.mxu0 %v1670
    %2674 = vmatpush.bf16.msra.mxu0 %v1664
    %2675 = vmatpush.bf16.msra.mxu0 %v1658
    %2676 = vmatpush.bf16.msra.mxu0 %v1652
    %2677 = vmatmul.bf16.gmra.mxu0 %v484
    %v2678 = vpop.f32.mrf.mxu0
    %v2679 = vadd.f32 %v2666, %v2678
    %v2680 = vpop.f32.mrf.mxu0
    %2681 = vdwg.mxu0
    %2682 = vmatpush.bf16.msra.mxu0 %v1742
    %2683 = vmatpush.bf16.msra.mxu0 %v1736
    %2684 = vmatpush.bf16.msra.mxu0 %v1730
    %2685 = vmatpush.bf16.msra.mxu0 %v1724
    %2686 = vmatpush.bf16.msra.mxu0 %v1718
    %2687 = vmatpush.bf16.msra.mxu0 %v1712
    %2688 = vmatpush.bf16.msra.mxu0 %v1706
    %2689 = vmatpush.bf16.msra.mxu0 %v1700
    %2690 = vmatmul.bf16.gmra.mxu0 %v485
    %v2691 = vpop.f32.mrf.mxu0
    %v2692 = vadd.f32 %v2679, %v2691
    %v2693 = vpop.f32.mrf.mxu0
    %2694 = vdwg.mxu0
    %2695 = vmatpush.bf16.msra.mxu0 %v1790
    %2696 = vmatpush.bf16.msra.mxu0 %v1784
    %2697 = vmatpush.bf16.msra.mxu0 %v1778
    %2698 = vmatpush.bf16.msra.mxu0 %v1772
    %2699 = vmatpush.bf16.msra.mxu0 %v1766
    %2700 = vmatpush.bf16.msra.mxu0 %v1760
    %2701 = vmatpush.bf16.msra.mxu0 %v1754
    %2702 = vmatpush.bf16.msra.mxu0 %v1748
    %2703 = vmatmul.bf16.gmra.mxu0 %v486
    %v2704 = vpop.f32.mrf.mxu0
    %v2705 = vadd.f32 %v2692, %v2704
    %v2706 = vpop.f32.mrf.mxu0
    %2707 = vdwg.mxu0
    %2708 = vmatpush.bf16.msra.mxu0 %v1838
    %2709 = vmatpush.bf16.msra.mxu0 %v1832
    %2710 = vmatpush.bf16.msra.mxu0 %v1826
    %2711 = vmatpush.bf16.msra.mxu0 %v1820
    %2712 = vmatpush.bf16.msra.mxu0 %v1814
    %2713 = vmatpush.bf16.msra.mxu0 %v1808
    %2714 = vmatpush.bf16.msra.mxu0 %v1802
    %2715 = vmatpush.bf16.msra.mxu0 %v1796
    %2716 = vmatmul.bf16.gmra.mxu0 %v487
    %v2717 = vpop.f32.mrf.mxu0
    %v2718 = vadd.f32 %v2705, %v2717
    %v2719 = vpop.f32.mrf.mxu0
    %2720 = vdwg.mxu0
    %v2721 = vld [vmem:[#allocation8] sm:$0xff]
    %v2722 = vld [vmem:[#allocation8 + $0x8] sm:$0xff]
    %v2723 = vld [vmem:[#allocation8 + $0x10] sm:$0xff]
    %v2724 = vld [vmem:[#allocation8 + $0x18] sm:$0xff]
    %v2725 = vld [vmem:[#allocation8 + $0x20] sm:$0xff]
    %v2726 = vld [vmem:[#allocation8 + $0x28] sm:$0xff]
    %v2727 = vld [vmem:[#allocation8 + $0x30] sm:$0xff]
    %v2728 = vld [vmem:[#allocation8 + $0x38] sm:$0xff]
    %v2729 = vld [vmem:[#allocation8 + $0x40] sm:$0xff]
    %v2730 = vld [vmem:[#allocation8 + $0x48] sm:$0xff]
    %v2731 = vld [vmem:[#allocation8 + $0x50] sm:$0xff]
    %v2732 = vld [vmem:[#allocation8 + $0x58] sm:$0xff]
    %v2733 = vld [vmem:[#allocation8 + $0x60] sm:$0xff]
    %v2734 = vld [vmem:[#allocation8 + $0x68] sm:$0xff]
    %v2735 = vld [vmem:[#allocation8 + $0x70] sm:$0xff]
    %v2736 = vld [vmem:[#allocation8 + $0x78] sm:$0xff]
    %v2737 = vld [vmem:[#allocation8 + $0x80] sm:$0xff]
    %v2738 = vld [vmem:[#allocation8 + $0x88] sm:$0xff]
    %v2739 = vld [vmem:[#allocation8 + $0x90] sm:$0xff]
    %v2740 = vld [vmem:[#allocation8 + $0x98] sm:$0xff]
    %v2741 = vld [vmem:[#allocation8 + $0xa0] sm:$0xff]
    %v2742 = vld [vmem:[#allocation8 + $0xa8] sm:$0xff]
    %v2743 = vld [vmem:[#allocation8 + $0xb0] sm:$0xff]
    %v2744 = vld [vmem:[#allocation8 + $0xb8] sm:$0xff]
    %v2745 = vld [vmem:[#allocation8 + $0xc0] sm:$0xff]
    %v2746 = vld [vmem:[#allocation8 + $0xc8] sm:$0xff]
    %v2747 = vld [vmem:[#allocation8 + $0xd0] sm:$0xff]
    %v2748 = vld [vmem:[#allocation8 + $0xd8] sm:$0xff]
    %v2749 = vld [vmem:[#allocation8 + $0xe0] sm:$0xff]
    %v2750 = vld [vmem:[#allocation8 + $0xe8] sm:$0xff]
    %v2751 = vld [vmem:[#allocation8 + $0xf0] sm:$0xff]
    %v2752 = vld [vmem:[#allocation8 + $0xf8] sm:$0xff]
    %v2753 = vld [vmem:[#allocation8 + $0x100] sm:$0xff]
    %v2754 = vld [vmem:[#allocation8 + $0x108] sm:$0xff]
    %v2755 = vld [vmem:[#allocation8 + $0x110] sm:$0xff]
    %v2756 = vld [vmem:[#allocation8 + $0x118] sm:$0xff]
    %v2757 = vld [vmem:[#allocation8 + $0x120] sm:$0xff]
    %v2758 = vld [vmem:[#allocation8 + $0x128] sm:$0xff]
    %v2759 = vld [vmem:[#allocation8 + $0x130] sm:$0xff]
    %v2760 = vld [vmem:[#allocation8 + $0x138] sm:$0xff]
    %v2761 = vld [vmem:[#allocation8 + $0x140] sm:$0xff]
    %v2762 = vld [vmem:[#allocation8 + $0x148] sm:$0xff]
    %v2763 = vld [vmem:[#allocation8 + $0x150] sm:$0xff]
    %v2764 = vld [vmem:[#allocation8 + $0x158] sm:$0xff]
    %v2765 = vld [vmem:[#allocation8 + $0x160] sm:$0xff]
    %v2766 = vld [vmem:[#allocation8 + $0x168] sm:$0xff]
    %v2767 = vld [vmem:[#allocation8 + $0x170] sm:$0xff]
    %v2768 = vld [vmem:[#allocation8 + $0x178] sm:$0xff]
    %v2769 = vld [vmem:[#allocation8 + $0x180] sm:$0xff]
    %v2770 = vld [vmem:[#allocation8 + $0x188] sm:$0xff]
    %v2771 = vld [vmem:[#allocation8 + $0x190] sm:$0xff]
    %v2772 = vld [vmem:[#allocation8 + $0x198] sm:$0xff]
    %v2773 = vld [vmem:[#allocation8 + $0x1a0] sm:$0xff]
    %v2774 = vld [vmem:[#allocation8 + $0x1a8] sm:$0xff]
    %v2775 = vld [vmem:[#allocation8 + $0x1b0] sm:$0xff]
    %v2776 = vld [vmem:[#allocation8 + $0x1b8] sm:$0xff]
    %v2777 = vld [vmem:[#allocation8 + $0x1c0] sm:$0xff]
    %v2778 = vld [vmem:[#allocation8 + $0x1c8] sm:$0xff]
    %v2779 = vld [vmem:[#allocation8 + $0x1d0] sm:$0xff]
    %v2780 = vld [vmem:[#allocation8 + $0x1d8] sm:$0xff]
    %v2781 = vld [vmem:[#allocation8 + $0x1e0] sm:$0xff]
    %v2782 = vld [vmem:[#allocation8 + $0x1e8] sm:$0xff]
    %v2783 = vld [vmem:[#allocation8 + $0x1f0] sm:$0xff]
    %v2784 = vld [vmem:[#allocation8 + $0x1f8] sm:$0xff]
    %v2785 = vld [vmem:[#allocation8 + $0x200] sm:$0xff]
    %v2786 = vld [vmem:[#allocation8 + $0x208] sm:$0xff]
    %v2787 = vld [vmem:[#allocation8 + $0x210] sm:$0xff]
    %v2788 = vld [vmem:[#allocation8 + $0x218] sm:$0xff]
    %v2789 = vld [vmem:[#allocation8 + $0x220] sm:$0xff]
    %v2790 = vld [vmem:[#allocation8 + $0x228] sm:$0xff]
    %v2791 = vld [vmem:[#allocation8 + $0x230] sm:$0xff]
    %v2792 = vld [vmem:[#allocation8 + $0x238] sm:$0xff]
    %v2793 = vld [vmem:[#allocation8 + $0x240] sm:$0xff]
    %v2794 = vld [vmem:[#allocation8 + $0x248] sm:$0xff]
    %v2795 = vld [vmem:[#allocation8 + $0x250] sm:$0xff]
    %v2796 = vld [vmem:[#allocation8 + $0x258] sm:$0xff]
    %v2797 = vld [vmem:[#allocation8 + $0x260] sm:$0xff]
    %v2798 = vld [vmem:[#allocation8 + $0x268] sm:$0xff]
    %v2799 = vld [vmem:[#allocation8 + $0x270] sm:$0xff]
    %v2800 = vld [vmem:[#allocation8 + $0x278] sm:$0xff]
    %v2801 = vld [vmem:[#allocation8 + $0x280] sm:$0xff]
    %v2802 = vld [vmem:[#allocation8 + $0x288] sm:$0xff]
    %v2803 = vld [vmem:[#allocation8 + $0x290] sm:$0xff]
    %v2804 = vld [vmem:[#allocation8 + $0x298] sm:$0xff]
    %v2805 = vld [vmem:[#allocation8 + $0x2a0] sm:$0xff]
    %v2806 = vld [vmem:[#allocation8 + $0x2a8] sm:$0xff]
    %v2807 = vld [vmem:[#allocation8 + $0x2b0] sm:$0xff]
    %v2808 = vld [vmem:[#allocation8 + $0x2b8] sm:$0xff]
    %v2809 = vld [vmem:[#allocation8 + $0x2c0] sm:$0xff]
    %v2810 = vld [vmem:[#allocation8 + $0x2c8] sm:$0xff]
    %v2811 = vld [vmem:[#allocation8 + $0x2d0] sm:$0xff]
    %v2812 = vld [vmem:[#allocation8 + $0x2d8] sm:$0xff]
    %v2813 = vld [vmem:[#allocation8 + $0x2e0] sm:$0xff]
    %v2814 = vld [vmem:[#allocation8 + $0x2e8] sm:$0xff]
    %v2815 = vld [vmem:[#allocation8 + $0x2f0] sm:$0xff]
    %v2816 = vld [vmem:[#allocation8 + $0x2f8] sm:$0xff]
    %v2817 = vld [vmem:[#allocation9] sm:$0x3f]
    %v2819 = vperm.slane %v2817, 0
    %v2820 = vperm.slane %v2817, 1
    %v2821 = vperm.slane %v2817, 2
    %v2822 = vperm.slane %v2817, 3
    %v2823 = vperm.slane %v2817, 4
    %v2824 = vperm.slane %v2817, 5
    %v2927 = vunpack.c.l.b16 %v2721
    %v2928 = vunpack.c.h.b16 %v2721
    %v2929 = vunpack.c.l.b16 %v2722
    %v2930 = vunpack.c.h.b16 %v2722
    %v2931 = vunpack.c.l.b16 %v2723
    %v2932 = vunpack.c.h.b16 %v2723
    %v2933 = vunpack.c.l.b16 %v2724
    %v2934 = vunpack.c.h.b16 %v2724
    %v2935 = vunpack.c.l.b16 %v2725
    %v2936 = vunpack.c.h.b16 %v2725
    %v2937 = vunpack.c.l.b16 %v2726
    %v2938 = vunpack.c.h.b16 %v2726
    %v2939 = vunpack.c.l.b16 %v2727
    %v2940 = vunpack.c.h.b16 %v2727
    %v2941 = vunpack.c.l.b16 %v2728
    %v2942 = vunpack.c.h.b16 %v2728
    %v2943 = vunpack.c.l.b16 %v2729
    %v2944 = vunpack.c.h.b16 %v2729
    %v2945 = vunpack.c.l.b16 %v2730
    %v2946 = vunpack.c.h.b16 %v2730
    %v2947 = vunpack.c.l.b16 %v2731
    %v2948 = vunpack.c.h.b16 %v2731
    %v2949 = vunpack.c.l.b16 %v2732
    %v2950 = vunpack.c.h.b16 %v2732
    %v2951 = vunpack.c.l.b16 %v2733
    %v2952 = vunpack.c.h.b16 %v2733
    %v2953 = vunpack.c.l.b16 %v2734
    %v2954 = vunpack.c.h.b16 %v2734
    %v2955 = vunpack.c.l.b16 %v2735
    %v2956 = vunpack.c.h.b16 %v2735
    %v2957 = vunpack.c.l.b16 %v2736
    %v2958 = vunpack.c.h.b16 %v2736
    %v2959 = vunpack.c.l.b16 %v2737
    %v2960 = vunpack.c.h.b16 %v2737
    %v2961 = vunpack.c.l.b16 %v2738
    %v2962 = vunpack.c.h.b16 %v2738
    %v2963 = vunpack.c.l.b16 %v2739
    %v2964 = vunpack.c.h.b16 %v2739
    %v2965 = vunpack.c.l.b16 %v2740
    %v2966 = vunpack.c.h.b16 %v2740
    %v2967 = vunpack.c.l.b16 %v2741
    %v2968 = vunpack.c.h.b16 %v2741
    %v2969 = vunpack.c.l.b16 %v2742
    %v2970 = vunpack.c.h.b16 %v2742
    %v2971 = vunpack.c.l.b16 %v2743
    %v2972 = vunpack.c.h.b16 %v2743
    %v2973 = vunpack.c.l.b16 %v2744
    %v2974 = vunpack.c.h.b16 %v2744
    %v2975 = vunpack.c.l.b16 %v2745
    %v2976 = vunpack.c.h.b16 %v2745
    %v2977 = vunpack.c.l.b16 %v2746
    %v2978 = vunpack.c.h.b16 %v2746
    %v2979 = vunpack.c.l.b16 %v2747
    %v2980 = vunpack.c.h.b16 %v2747
    %v2981 = vunpack.c.l.b16 %v2748
    %v2982 = vunpack.c.h.b16 %v2748
    %v2983 = vunpack.c.l.b16 %v2749
    %v2984 = vunpack.c.h.b16 %v2749
    %v2985 = vunpack.c.l.b16 %v2750
    %v2986 = vunpack.c.h.b16 %v2750
    %v2987 = vunpack.c.l.b16 %v2751
    %v2988 = vunpack.c.h.b16 %v2751
    %v2989 = vunpack.c.l.b16 %v2752
    %v2990 = vunpack.c.h.b16 %v2752
    %v2991 = vunpack.c.l.b16 %v2753
    %v2992 = vunpack.c.h.b16 %v2753
    %v2993 = vunpack.c.l.b16 %v2754
    %v2994 = vunpack.c.h.b16 %v2754
    %v2995 = vunpack.c.l.b16 %v2755
    %v2996 = vunpack.c.h.b16 %v2755
    %v2997 = vunpack.c.l.b16 %v2756
    %v2998 = vunpack.c.h.b16 %v2756
    %v2999 = vunpack.c.l.b16 %v2757
    %v3000 = vunpack.c.h.b16 %v2757
    %v3001 = vunpack.c.l.b16 %v2758
    %v3002 = vunpack.c.h.b16 %v2758
    %v3003 = vunpack.c.l.b16 %v2759
    %v3004 = vunpack.c.h.b16 %v2759
    %v3005 = vunpack.c.l.b16 %v2760
    %v3006 = vunpack.c.h.b16 %v2760
    %v3007 = vunpack.c.l.b16 %v2761
    %v3008 = vunpack.c.h.b16 %v2761
    %v3009 = vunpack.c.l.b16 %v2762
    %v3010 = vunpack.c.h.b16 %v2762
    %v3011 = vunpack.c.l.b16 %v2763
    %v3012 = vunpack.c.h.b16 %v2763
    %v3013 = vunpack.c.l.b16 %v2764
    %v3014 = vunpack.c.h.b16 %v2764
    %v3015 = vunpack.c.l.b16 %v2765
    %v3016 = vunpack.c.h.b16 %v2765
    %v3017 = vunpack.c.l.b16 %v2766
    %v3018 = vunpack.c.h.b16 %v2766
    %v3019 = vunpack.c.l.b16 %v2767
    %v3020 = vunpack.c.h.b16 %v2767
    %v3021 = vunpack.c.l.b16 %v2768
    %v3022 = vunpack.c.h.b16 %v2768
    %v3023 = vunpack.c.l.b16 %v2769
    %v3024 = vunpack.c.h.b16 %v2769
    %v3025 = vunpack.c.l.b16 %v2770
    %v3026 = vunpack.c.h.b16 %v2770
    %v3027 = vunpack.c.l.b16 %v2771
    %v3028 = vunpack.c.h.b16 %v2771
    %v3029 = vunpack.c.l.b16 %v2772
    %v3030 = vunpack.c.h.b16 %v2772
    %v3031 = vunpack.c.l.b16 %v2773
    %v3032 = vunpack.c.h.b16 %v2773
    %v3033 = vunpack.c.l.b16 %v2774
    %v3034 = vunpack.c.h.b16 %v2774
    %v3035 = vunpack.c.l.b16 %v2775
    %v3036 = vunpack.c.h.b16 %v2775
    %v3037 = vunpack.c.l.b16 %v2776
    %v3038 = vunpack.c.h.b16 %v2776
    %v3039 = vunpack.c.l.b16 %v2777
    %v3040 = vunpack.c.h.b16 %v2777
    %v3041 = vunpack.c.l.b16 %v2778
    %v3042 = vunpack.c.h.b16 %v2778
    %v3043 = vunpack.c.l.b16 %v2779
    %v3044 = vunpack.c.h.b16 %v2779
    %v3045 = vunpack.c.l.b16 %v2780
    %v3046 = vunpack.c.h.b16 %v2780
    %v3047 = vunpack.c.l.b16 %v2781
    %v3048 = vunpack.c.h.b16 %v2781
    %v3049 = vunpack.c.l.b16 %v2782
    %v3050 = vunpack.c.h.b16 %v2782
    %v3051 = vunpack.c.l.b16 %v2783
    %v3052 = vunpack.c.h.b16 %v2783
    %v3053 = vunpack.c.l.b16 %v2784
    %v3054 = vunpack.c.h.b16 %v2784
    %v3055 = vunpack.c.l.b16 %v2785
    %v3056 = vunpack.c.h.b16 %v2785
    %v3057 = vunpack.c.l.b16 %v2786
    %v3058 = vunpack.c.h.b16 %v2786
    %v3059 = vunpack.c.l.b16 %v2787
    %v3060 = vunpack.c.h.b16 %v2787
    %v3061 = vunpack.c.l.b16 %v2788
    %v3062 = vunpack.c.h.b16 %v2788
    %v3063 = vunpack.c.l.b16 %v2789
    %v3064 = vunpack.c.h.b16 %v2789
    %v3065 = vunpack.c.l.b16 %v2790
    %v3066 = vunpack.c.h.b16 %v2790
    %v3067 = vunpack.c.l.b16 %v2791
    %v3068 = vunpack.c.h.b16 %v2791
    %v3069 = vunpack.c.l.b16 %v2792
    %v3070 = vunpack.c.h.b16 %v2792
    %v3071 = vunpack.c.l.b16 %v2793
    %v3072 = vunpack.c.h.b16 %v2793
    %v3073 = vunpack.c.l.b16 %v2794
    %v3074 = vunpack.c.h.b16 %v2794
    %v3075 = vunpack.c.l.b16 %v2795
    %v3076 = vunpack.c.h.b16 %v2795
    %v3077 = vunpack.c.l.b16 %v2796
    %v3078 = vunpack.c.h.b16 %v2796
    %v3079 = vunpack.c.l.b16 %v2797
    %v3080 = vunpack.c.h.b16 %v2797
    %v3081 = vunpack.c.l.b16 %v2798
    %v3082 = vunpack.c.h.b16 %v2798
    %v3083 = vunpack.c.l.b16 %v2799
    %v3084 = vunpack.c.h.b16 %v2799
    %v3085 = vunpack.c.l.b16 %v2800
    %v3086 = vunpack.c.h.b16 %v2800
    %v3087 = vunpack.c.l.b16 %v2801
    %v3088 = vunpack.c.h.b16 %v2801
    %v3089 = vunpack.c.l.b16 %v2802
    %v3090 = vunpack.c.h.b16 %v2802
    %v3091 = vunpack.c.l.b16 %v2803
    %v3092 = vunpack.c.h.b16 %v2803
    %v3093 = vunpack.c.l.b16 %v2804
    %v3094 = vunpack.c.h.b16 %v2804
    %v3095 = vunpack.c.l.b16 %v2805
    %v3096 = vunpack.c.h.b16 %v2805
    %v3097 = vunpack.c.l.b16 %v2806
    %v3098 = vunpack.c.h.b16 %v2806
    %v3099 = vunpack.c.l.b16 %v2807
    %v3100 = vunpack.c.h.b16 %v2807
    %v3101 = vunpack.c.l.b16 %v2808
    %v3102 = vunpack.c.h.b16 %v2808
    %v3103 = vunpack.c.l.b16 %v2809
    %v3104 = vunpack.c.h.b16 %v2809
    %v3105 = vunpack.c.l.b16 %v2810
    %v3106 = vunpack.c.h.b16 %v2810
    %v3107 = vunpack.c.l.b16 %v2811
    %v3108 = vunpack.c.h.b16 %v2811
    %v3109 = vunpack.c.l.b16 %v2812
    %v3110 = vunpack.c.h.b16 %v2812
    %v3111 = vunpack.c.l.b16 %v2813
    %v3112 = vunpack.c.h.b16 %v2813
    %v3113 = vunpack.c.l.b16 %v2814
    %v3114 = vunpack.c.h.b16 %v2814
    %v3115 = vunpack.c.l.b16 %v2815
    %v3116 = vunpack.c.h.b16 %v2815
    %v3117 = vunpack.c.l.b16 %v2816
    %v3118 = vunpack.c.h.b16 %v2816
    %v3119 = vpack.c.b16 %v2933, %v2927
    %v3120 = vpack.c.b16 %v2934, %v2928
    %v3121 = vpack.c.b16 %v2935, %v2929
    %v3122 = vpack.c.b16 %v2936, %v2930
    %v3123 = vpack.c.b16 %v2937, %v2931
    %v3124 = vpack.c.b16 %v2938, %v2932
    %v3125 = vpack.c.b16 %v2945, %v2939
    %v3126 = vpack.c.b16 %v2946, %v2940
    %v3127 = vpack.c.b16 %v2947, %v2941
    %v3128 = vpack.c.b16 %v2948, %v2942
    %v3129 = vpack.c.b16 %v2949, %v2943
    %v3130 = vpack.c.b16 %v2950, %v2944
    %v3131 = vpack.c.b16 %v2957, %v2951
    %v3132 = vpack.c.b16 %v2958, %v2952
    %v3133 = vpack.c.b16 %v2959, %v2953
    %v3134 = vpack.c.b16 %v2960, %v2954
    %v3135 = vpack.c.b16 %v2961, %v2955
    %v3136 = vpack.c.b16 %v2962, %v2956
    %v3137 = vpack.c.b16 %v2969, %v2963
    %v3138 = vpack.c.b16 %v2970, %v2964
    %v3139 = vpack.c.b16 %v2971, %v2965
    %v3140 = vpack.c.b16 %v2972, %v2966
    %v3141 = vpack.c.b16 %v2973, %v2967
    %v3142 = vpack.c.b16 %v2974, %v2968
    %v3143 = vpack.c.b16 %v2981, %v2975
    %v3144 = vpack.c.b16 %v2982, %v2976
    %v3145 = vpack.c.b16 %v2983, %v2977
    %v3146 = vpack.c.b16 %v2984, %v2978
    %v3147 = vpack.c.b16 %v2985, %v2979
    %v3148 = vpack.c.b16 %v2986, %v2980
    %v3149 = vpack.c.b16 %v2993, %v2987
    %v3150 = vpack.c.b16 %v2994, %v2988
    %v3151 = vpack.c.b16 %v2995, %v2989
    %v3152 = vpack.c.b16 %v2996, %v2990
    %v3153 = vpack.c.b16 %v2997, %v2991
    %v3154 = vpack.c.b16 %v2998, %v2992
    %v3155 = vpack.c.b16 %v3005, %v2999
    %v3156 = vpack.c.b16 %v3006, %v3000
    %v3157 = vpack.c.b16 %v3007, %v3001
    %v3158 = vpack.c.b16 %v3008, %v3002
    %v3159 = vpack.c.b16 %v3009, %v3003
    %v3160 = vpack.c.b16 %v3010, %v3004
    %v3161 = vpack.c.b16 %v3017, %v3011
    %v3162 = vpack.c.b16 %v3018, %v3012
    %v3163 = vpack.c.b16 %v3019, %v3013
    %v3164 = vpack.c.b16 %v3020, %v3014
    %v3165 = vpack.c.b16 %v3021, %v3015
    %v3166 = vpack.c.b16 %v3022, %v3016
    %v3167 = vpack.c.b16 %v3029, %v3023
    %v3168 = vpack.c.b16 %v3030, %v3024
    %v3169 = vpack.c.b16 %v3031, %v3025
    %v3170 = vpack.c.b16 %v3032, %v3026
    %v3171 = vpack.c.b16 %v3033, %v3027
    %v3172 = vpack.c.b16 %v3034, %v3028
    %v3173 = vpack.c.b16 %v3041, %v3035
    %v3174 = vpack.c.b16 %v3042, %v3036
    %v3175 = vpack.c.b16 %v3043, %v3037
    %v3176 = vpack.c.b16 %v3044, %v3038
    %v3177 = vpack.c.b16 %v3045, %v3039
    %v3178 = vpack.c.b16 %v3046, %v3040
    %v3179 = vpack.c.b16 %v3053, %v3047
    %v3180 = vpack.c.b16 %v3054, %v3048
    %v3181 = vpack.c.b16 %v3055, %v3049
    %v3182 = vpack.c.b16 %v3056, %v3050
    %v3183 = vpack.c.b16 %v3057, %v3051
    %v3184 = vpack.c.b16 %v3058, %v3052
    %v3185 = vpack.c.b16 %v3065, %v3059
    %v3186 = vpack.c.b16 %v3066, %v3060
    %v3187 = vpack.c.b16 %v3067, %v3061
    %v3188 = vpack.c.b16 %v3068, %v3062
    %v3189 = vpack.c.b16 %v3069, %v3063
    %v3190 = vpack.c.b16 %v3070, %v3064
    %v3191 = vpack.c.b16 %v3077, %v3071
    %v3192 = vpack.c.b16 %v3078, %v3072
    %v3193 = vpack.c.b16 %v3079, %v3073
    %v3194 = vpack.c.b16 %v3080, %v3074
    %v3195 = vpack.c.b16 %v3081, %v3075
    %v3196 = vpack.c.b16 %v3082, %v3076
    %v3197 = vpack.c.b16 %v3089, %v3083
    %v3198 = vpack.c.b16 %v3090, %v3084
    %v3199 = vpack.c.b16 %v3091, %v3085
    %v3200 = vpack.c.b16 %v3092, %v3086
    %v3201 = vpack.c.b16 %v3093, %v3087
    %v3202 = vpack.c.b16 %v3094, %v3088
    %v3203 = vpack.c.b16 %v3101, %v3095
    %v3204 = vpack.c.b16 %v3102, %v3096
    %v3205 = vpack.c.b16 %v3103, %v3097
    %v3206 = vpack.c.b16 %v3104, %v3098
    %v3207 = vpack.c.b16 %v3105, %v3099
    %v3208 = vpack.c.b16 %v3106, %v3100
    %v3209 = vpack.c.b16 %v3113, %v3107
    %v3210 = vpack.c.b16 %v3114, %v3108
    %v3211 = vpack.c.b16 %v3115, %v3109
    %v3212 = vpack.c.b16 %v3116, %v3110
    %v3213 = vpack.c.b16 %v3117, %v3111
    %v3214 = vpack.c.b16 %v3118, %v3112
    %3311 = vmatpush.bf16.msra.mxu0 %v3161
    %3312 = vmatpush.bf16.msra.mxu0 %v3155
    %3313 = vmatpush.bf16.msra.mxu0 %v3149
    %3314 = vmatpush.bf16.msra.mxu0 %v3143
    %3315 = vmatpush.bf16.msra.mxu0 %v3137
    %3316 = vmatpush.bf16.msra.mxu0 %v3131
    %3317 = vmatpush.bf16.msra.mxu0 %v3125
    %3318 = vmatpush.bf16.msra.mxu0 %v3119
    %3319 = vmatmul.bf16.gmra.mxu0 0
    %v3320 = vpop.f32.mrf.mxu0
    %v3321 = vadd.f32 %v2819, %v3320
    %v3322 = vpop.f32.mrf.mxu0
    %3323 = vdwg.mxu0
    %3324 = vmatpush.bf16.msra.mxu0 %v3209
    %3325 = vmatpush.bf16.msra.mxu0 %v3203
    %3326 = vmatpush.bf16.msra.mxu0 %v3197
    %3327 = vmatpush.bf16.msra.mxu0 %v3191
    %3328 = vmatpush.bf16.msra.mxu0 %v3185
    %3329 = vmatpush.bf16.msra.mxu0 %v3179
    %3330 = vmatpush.bf16.msra.mxu0 %v3173
    %3331 = vmatpush.bf16.msra.mxu0 %v3167
    %3332 = vmatmul.bf16.gmra.mxu0 0
    %v3333 = vpop.f32.mrf.mxu0
    %v3334 = vadd.f32 %v3321, %v3333
    %v3335 = vpop.f32.mrf.mxu0
    %3336 = vdwg.mxu0
    %3337 = vmatpush.bf16.msra.mxu0 %v3162
    %3338 = vmatpush.bf16.msra.mxu0 %v3156
    %3339 = vmatpush.bf16.msra.mxu0 %v3150
    %3340 = vmatpush.bf16.msra.mxu0 %v3144
    %3341 = vmatpush.bf16.msra.mxu0 %v3138
    %3342 = vmatpush.bf16.msra.mxu0 %v3132
    %3343 = vmatpush.bf16.msra.mxu0 %v3126
    %3344 = vmatpush.bf16.msra.mxu0 %v3120
    %3345 = vmatmul.bf16.gmra.mxu0 0
    %v3346 = vpop.f32.mrf.mxu0
    %v3347 = vadd.f32 %v2820, %v3346
    %v3348 = vpop.f32.mrf.mxu0
    %3349 = vdwg.mxu0
    %3350 = vmatpush.bf16.msra.mxu0 %v3210
    %3351 = vmatpush.bf16.msra.mxu0 %v3204
    %3352 = vmatpush.bf16.msra.mxu0 %v3198
    %3353 = vmatpush.bf16.msra.mxu0 %v3192
    %3354 = vmatpush.bf16.msra.mxu0 %v3186
    %3355 = vmatpush.bf16.msra.mxu0 %v3180
    %3356 = vmatpush.bf16.msra.mxu0 %v3174
    %3357 = vmatpush.bf16.msra.mxu0 %v3168
    %3358 = vmatmul.bf16.gmra.mxu0 0
    %v3359 = vpop.f32.mrf.mxu0
    %v3360 = vadd.f32 %v3347, %v3359
    %v3361 = vpop.f32.mrf.mxu0
    %3362 = vdwg.mxu0
    %3363 = vmatpush.bf16.msra.mxu0 %v3163
    %3364 = vmatpush.bf16.msra.mxu0 %v3157
    %3365 = vmatpush.bf16.msra.mxu0 %v3151
    %3366 = vmatpush.bf16.msra.mxu0 %v3145
    %3367 = vmatpush.bf16.msra.mxu0 %v3139
    %3368 = vmatpush.bf16.msra.mxu0 %v3133
    %3369 = vmatpush.bf16.msra.mxu0 %v3127
    %3370 = vmatpush.bf16.msra.mxu0 %v3121
    %3371 = vmatmul.bf16.gmra.mxu0 0
    %v3372 = vpop.f32.mrf.mxu0
    %v3373 = vadd.f32 %v2821, %v3372
    %v3374 = vpop.f32.mrf.mxu0
    %3375 = vdwg.mxu0
    %3376 = vmatpush.bf16.msra.mxu0 %v3211
    %3377 = vmatpush.bf16.msra.mxu0 %v3205
    %3378 = vmatpush.bf16.msra.mxu0 %v3199
    %3379 = vmatpush.bf16.msra.mxu0 %v3193
    %3380 = vmatpush.bf16.msra.mxu0 %v3187
    %3381 = vmatpush.bf16.msra.mxu0 %v3181
    %3382 = vmatpush.bf16.msra.mxu0 %v3175
    %3383 = vmatpush.bf16.msra.mxu0 %v3169
    %3384 = vmatmul.bf16.gmra.mxu0 0
    %v3385 = vpop.f32.mrf.mxu0
    %v3386 = vadd.f32 %v3373, %v3385
    %v3387 = vpop.f32.mrf.mxu0
    %3388 = vdwg.mxu0
    %3389 = vmatpush.bf16.msra.mxu0 %v3164
    %3390 = vmatpush.bf16.msra.mxu0 %v3158
    %3391 = vmatpush.bf16.msra.mxu0 %v3152
    %3392 = vmatpush.bf16.msra.mxu0 %v3146
    %3393 = vmatpush.bf16.msra.mxu0 %v3140
    %3394 = vmatpush.bf16.msra.mxu0 %v3134
    %3395 = vmatpush.bf16.msra.mxu0 %v3128
    %3396 = vmatpush.bf16.msra.mxu0 %v3122
    %3397 = vmatmul.bf16.gmra.mxu0 0
    %v3398 = vpop.f32.mrf.mxu0
    %v3399 = vadd.f32 %v2822, %v3398
    %v3400 = vpop.f32.mrf.mxu0
    %3401 = vdwg.mxu0
    %3402 = vmatpush.bf16.msra.mxu0 %v3212
    %3403 = vmatpush.bf16.msra.mxu0 %v3206
    %3404 = vmatpush.bf16.msra.mxu0 %v3200
    %3405 = vmatpush.bf16.msra.mxu0 %v3194
    %3406 = vmatpush.bf16.msra.mxu0 %v3188
    %3407 = vmatpush.bf16.msra.mxu0 %v3182
    %3408 = vmatpush.bf16.msra.mxu0 %v3176
    %3409 = vmatpush.bf16.msra.mxu0 %v3170
    %3410 = vmatmul.bf16.gmra.mxu0 0
    %v3411 = vpop.f32.mrf.mxu0
    %v3412 = vadd.f32 %v3399, %v3411
    %v3413 = vpop.f32.mrf.mxu0
    %3414 = vdwg.mxu0
    %3415 = vmatpush.bf16.msra.mxu0 %v3165
    %3416 = vmatpush.bf16.msra.mxu0 %v3159
    %3417 = vmatpush.bf16.msra.mxu0 %v3153
    %3418 = vmatpush.bf16.msra.mxu0 %v3147
    %3419 = vmatpush.bf16.msra.mxu0 %v3141
    %3420 = vmatpush.bf16.msra.mxu0 %v3135
    %3421 = vmatpush.bf16.msra.mxu0 %v3129
    %3422 = vmatpush.bf16.msra.mxu0 %v3123
    %3423 = vmatmul.bf16.gmra.mxu0 0
    %v3424 = vpop.f32.mrf.mxu0
    %v3425 = vadd.f32 %v2823, %v3424
    %v3426 = vpop.f32.mrf.mxu0
    %3427 = vdwg.mxu0
    %3428 = vmatpush.bf16.msra.mxu0 %v3213
    %3429 = vmatpush.bf16.msra.mxu0 %v3207
    %3430 = vmatpush.bf16.msra.mxu0 %v3201
    %3431 = vmatpush.bf16.msra.mxu0 %v3195
    %3432 = vmatpush.bf16.msra.mxu0 %v3189
    %3433 = vmatpush.bf16.msra.mxu0 %v3183
    %3434 = vmatpush.bf16.msra.mxu0 %v3177
    %3435 = vmatpush.bf16.msra.mxu0 %v3171
    %3436 = vmatmul.bf16.gmra.mxu0 0
    %v3437 = vpop.f32.mrf.mxu0
    %v3438 = vadd.f32 %v3425, %v3437
    %v3439 = vpop.f32.mrf.mxu0
    %3440 = vdwg.mxu0
    %3441 = vmatpush.bf16.msra.mxu0 %v3166
    %3442 = vmatpush.bf16.msra.mxu0 %v3160
    %3443 = vmatpush.bf16.msra.mxu0 %v3154
    %3444 = vmatpush.bf16.msra.mxu0 %v3148
    %3445 = vmatpush.bf16.msra.mxu0 %v3142
    %3446 = vmatpush.bf16.msra.mxu0 %v3136
    %3447 = vmatpush.bf16.msra.mxu0 %v3130
    %3448 = vmatpush.bf16.msra.mxu0 %v3124
    %3449 = vmatmul.bf16.gmra.mxu0 0
    %v3450 = vpop.f32.mrf.mxu0
    %v3451 = vadd.f32 %v2824, %v3450
    %v3452 = vpop.f32.mrf.mxu0
    %3453 = vdwg.mxu0
    %3454 = vmatpush.bf16.msra.mxu0 %v3214
    %3455 = vmatpush.bf16.msra.mxu0 %v3208
    %3456 = vmatpush.bf16.msra.mxu0 %v3202
    %3457 = vmatpush.bf16.msra.mxu0 %v3196
    %3458 = vmatpush.bf16.msra.mxu0 %v3190
    %3459 = vmatpush.bf16.msra.mxu0 %v3184
    %3460 = vmatpush.bf16.msra.mxu0 %v3178
    %3461 = vmatpush.bf16.msra.mxu0 %v3172
    %3462 = vmatmul.bf16.gmra.mxu0 0
    %v3463 = vpop.f32.mrf.mxu0
    %v3464 = vadd.f32 %v3451, %v3463
    %v3465 = vpop.f32.mrf.mxu0
    %3466 = vdwg.mxu0
    %v3467 = vadd.f32 %v2263, %v3334
    %v3468 = vadd.f32 %v2354, %v3360
    %v3469 = vadd.f32 %v2445, %v3386
    %v3470 = vadd.f32 %v2536, %v3412
    %v3471 = vxor.u32 %v3467, 2147483648
    %v3472 = vxor.u32 %v3468, 2147483648
    %v3473 = vxor.u32 %v3469, 2147483648
    %v3474 = vxor.u32 %v3470, 2147483648
    %v3475 = vmul.f32 %v3471, 1.442695
    %v3476 = vpow.pop %v3475
    %v3477 = vmul.f32 %v3472, 1.442695
    %v3478 = vpow.pop %v3477
    %v3479 = vmul.f32 %v3473, 1.442695
    %v3480 = vpow.pop %v3479
    %v3481 = vmul.f32 %v3474, 1.442695
    %v3482 = vpow.pop %v3481
    %v3483 = vadd.f32 %v3476, 1.0
    %v3484 = vadd.f32 %v3478, 1.0
    %v3485 = vadd.f32 %v3480, 1.0
    %v3486 = vadd.f32 %v3482, 1.0
    %v3487 = vrcp.pop %v3483
    %v3488 = vmul.f32 %v3483, %v3487
    %v3489 = vsub.f32 1.0, %v3488
    %v3490 = vmul.f32 %v3487, %v3489
    %v3491 = vadd.f32 %v3487, %v3490
    %vm3492 = vweird.f32 %v3483
    %vm3493 = vweird.f32 %v3487
    %vm3494 = vmor %vm3492, %vm3493
    %v3495 = vsel %vm3494, %v3487, %v3491
    %v3496 = vand.u32 2147483647, %v3483
    %vm3497 = vcmp.eq.f32.partialorder %v3496, 8.507059e+37
    %v3498 = vand.u32 %v3483, 2147483648
    %v3499 = vor.u32 1.1754944e-38, %v3498
    %v3500 = vsel %vm3497, %v3499, %v3495
    %v3501 = vmul.f32 1.0, %v3500
    %v3502 = vrcp.pop %v3484
    %v3503 = vmul.f32 %v3484, %v3502
    %v3504 = vsub.f32 1.0, %v3503
    %v3505 = vmul.f32 %v3502, %v3504
    %v3506 = vadd.f32 %v3502, %v3505
    %vm3507 = vweird.f32 %v3484
    %vm3508 = vweird.f32 %v3502
    %vm3509 = vmor %vm3507, %vm3508
    %v3510 = vsel %vm3509, %v3502, %v3506
    %v3511 = vand.u32 2147483647, %v3484
    %vm3512 = vcmp.eq.f32.partialorder %v3511, 8.507059e+37
    %v3513 = vand.u32 %v3484, 2147483648
    %v3514 = vor.u32 1.1754944e-38, %v3513
    %v3515 = vsel %vm3512, %v3514, %v3510
    %v3516 = vmul.f32 1.0, %v3515
    %v3517 = vrcp.pop %v3485
    %v3518 = vmul.f32 %v3485, %v3517
    %v3519 = vsub.f32 1.0, %v3518
    %v3520 = vmul.f32 %v3517, %v3519
    %v3521 = vadd.f32 %v3517, %v3520
    %vm3522 = vweird.f32 %v3485
    %vm3523 = vweird.f32 %v3517
    %vm3524 = vmor %vm3522, %vm3523
    %v3525 = vsel %vm3524, %v3517, %v3521
    %v3526 = vand.u32 2147483647, %v3485
    %vm3527 = vcmp.eq.f32.partialorder %v3526, 8.507059e+37
    %v3528 = vand.u32 %v3485, 2147483648
    %v3529 = vor.u32 1.1754944e-38, %v3528
    %v3530 = vsel %vm3527, %v3529, %v3525
    %v3531 = vmul.f32 1.0, %v3530
    %v3532 = vrcp.pop %v3486
    %v3533 = vmul.f32 %v3486, %v3532
    %v3534 = vsub.f32 1.0, %v3533
    %v3535 = vmul.f32 %v3532, %v3534
    %v3536 = vadd.f32 %v3532, %v3535
    %vm3537 = vweird.f32 %v3486
    %vm3538 = vweird.f32 %v3532
    %vm3539 = vmor %vm3537, %vm3538
    %v3540 = vsel %vm3539, %v3532, %v3536
    %v3541 = vand.u32 2147483647, %v3486
    %vm3542 = vcmp.eq.f32.partialorder %v3541, 8.507059e+37
    %v3543 = vand.u32 %v3486, 2147483648
    %v3544 = vor.u32 1.1754944e-38, %v3543
    %v3545 = vsel %vm3542, %v3544, %v3540
    %v3546 = vmul.f32 1.0, %v3545
    %v3547 = vmul.f32 %v3501, %v3438
    %v3548 = vmul.f32 %v3516, %v3464
    %v3549 = vadd.f32 %v2627, %v3547
    %v3550 = vadd.f32 %v2718, %v3548
    %v3551 = vtanh.pop %v3549
    %v3552 = vtanh.pop %v3550
    %v3553 = vsub.f32 1.0, %v3531
    %v3554 = vsub.f32 1.0, %v3546
    %v3555 = vmul.f32 %v3553, %v3551
    %v3556 = vmul.f32 %v3554, %v3552
    %v3557 = vmul.f32 %v3531, 0.0
    %v3558 = vmul.f32 %v3546, 0.0
    %v3559 = vadd.f32 %v3555, %v3557
    %v3560 = vadd.f32 %v3556, %v3558
    %3561 = vst [vmem:[#allocation2] sm:$0xff] %v3559
    %3562 = vst [vmem:[#allocation2 + $0x8] sm:$0xff] %v3560
    %v3563 = vld [vmem:[#allocation2] sm:$0xff]
    %v3564 = vld [vmem:[#allocation2 + $0x8] sm:$0xff]
    %v3565 = vpack.c.bf16 %v3563, %v3563
    %v3566 = vpack.c.bf16 %v3564, %v3564
    %v3567 = vld [vmem:[#allocation11] sm:$0xf]
    %v3568 = vld [vmem:[#allocation11 + $0x4] sm:$0xf]
    %v3569 = vld [vmem:[#allocation11 + $0x8] sm:$0xf]
    %v3570 = vld [vmem:[#allocation11 + $0xc] sm:$0xf]
    %v3571 = vld [vmem:[#allocation11 + $0x10] sm:$0xf]
    %v3572 = vld [vmem:[#allocation11 + $0x14] sm:$0xf]
    %v3573 = vld [vmem:[#allocation11 + $0x18] sm:$0xf]
    %v3574 = vld [vmem:[#allocation11 + $0x1c] sm:$0xf]
    %v3575 = vld [vmem:[#allocation11 + $0x20] sm:$0xf]
    %v3576 = vld [vmem:[#allocation11 + $0x24] sm:$0xf]
    %v3577 = vld [vmem:[#allocation11 + $0x28] sm:$0xf]
    %v3578 = vld [vmem:[#allocation11 + $0x2c] sm:$0xf]
    %v3579 = vld [vmem:[#allocation11 + $0x30] sm:$0xf]
    %v3580 = vld [vmem:[#allocation11 + $0x34] sm:$0xf]
    %v3581 = vld [vmem:[#allocation11 + $0x38] sm:$0xf]
    %v3582 = vld [vmem:[#allocation11 + $0x3c] sm:$0xf]
    %v3583 = vld [vmem:[#allocation11 + $0x40] sm:$0xf]
    %v3584 = vld [vmem:[#allocation11 + $0x44] sm:$0xf]
    %v3585 = vld [vmem:[#allocation11 + $0x48] sm:$0xf]
    %v3586 = vld [vmem:[#allocation11 + $0x4c] sm:$0xf]
    %v3587 = vld [vmem:[#allocation11 + $0x50] sm:$0xf]
    %v3588 = vld [vmem:[#allocation11 + $0x54] sm:$0xf]
    %v3589 = vld [vmem:[#allocation11 + $0x58] sm:$0xf]
    %v3590 = vld [vmem:[#allocation11 + $0x5c] sm:$0xf]
    %v3591 = vld [vmem:[#allocation11 + $0x60] sm:$0xf]
    %v3592 = vld [vmem:[#allocation11 + $0x64] sm:$0xf]
    %v3593 = vld [vmem:[#allocation11 + $0x68] sm:$0xf]
    %v3594 = vld [vmem:[#allocation11 + $0x6c] sm:$0xf]
    %v3595 = vld [vmem:[#allocation11 + $0x70] sm:$0xf]
    %v3596 = vld [vmem:[#allocation11 + $0x74] sm:$0xf]
    %v3597 = vld [vmem:[#allocation11 + $0x78] sm:$0xf]
    %v3598 = vld [vmem:[#allocation11 + $0x7c] sm:$0xf]
    %v3599 = vld [vmem:[#allocation12] sm:$0x1]
    %v3601 = vperm.slane %v3599, 0
    %v3635 = vunpack.c.l.b16 %v3567
    %v3636 = vunpack.c.l.b16 %v3568
    %v3637 = vunpack.c.l.b16 %v3569
    %v3638 = vunpack.c.l.b16 %v3570
    %v3639 = vunpack.c.l.b16 %v3571
    %v3640 = vunpack.c.l.b16 %v3572
    %v3641 = vunpack.c.l.b16 %v3573
    %v3642 = vunpack.c.l.b16 %v3574
    %v3643 = vunpack.c.l.b16 %v3575
    %v3644 = vunpack.c.l.b16 %v3576
    %v3645 = vunpack.c.l.b16 %v3577
    %v3646 = vunpack.c.l.b16 %v3578
    %v3647 = vunpack.c.l.b16 %v3579
    %v3648 = vunpack.c.l.b16 %v3580
    %v3649 = vunpack.c.l.b16 %v3581
    %v3650 = vunpack.c.l.b16 %v3582
    %v3651 = vunpack.c.l.b16 %v3583
    %v3652 = vunpack.c.l.b16 %v3584
    %v3653 = vunpack.c.l.b16 %v3585
    %v3654 = vunpack.c.l.b16 %v3586
    %v3655 = vunpack.c.l.b16 %v3587
    %v3656 = vunpack.c.l.b16 %v3588
    %v3657 = vunpack.c.l.b16 %v3589
    %v3658 = vunpack.c.l.b16 %v3590
    %v3659 = vunpack.c.l.b16 %v3591
    %v3660 = vunpack.c.l.b16 %v3592
    %v3661 = vunpack.c.l.b16 %v3593
    %v3662 = vunpack.c.l.b16 %v3594
    %v3663 = vunpack.c.l.b16 %v3595
    %v3664 = vunpack.c.l.b16 %v3596
    %v3665 = vunpack.c.l.b16 %v3597
    %v3666 = vunpack.c.l.b16 %v3598
    %v3667 = vpack.c.b16 %v3636, %v3635
    %v3668 = vpack.c.b16 %v3638, %v3637
    %v3669 = vpack.c.b16 %v3640, %v3639
    %v3670 = vpack.c.b16 %v3642, %v3641
    %v3671 = vpack.c.b16 %v3644, %v3643
    %v3672 = vpack.c.b16 %v3646, %v3645
    %v3673 = vpack.c.b16 %v3648, %v3647
    %v3674 = vpack.c.b16 %v3650, %v3649
    %v3675 = vpack.c.b16 %v3652, %v3651
    %v3676 = vpack.c.b16 %v3654, %v3653
    %v3677 = vpack.c.b16 %v3656, %v3655
    %v3678 = vpack.c.b16 %v3658, %v3657
    %v3679 = vpack.c.b16 %v3660, %v3659
    %v3680 = vpack.c.b16 %v3662, %v3661
    %v3681 = vpack.c.b16 %v3664, %v3663
    %v3682 = vpack.c.b16 %v3666, %v3665
    %3699 = vmatpush.bf16.msra.mxu0 %v3674
    %3700 = vmatpush.bf16.msra.mxu0 %v3673
    %3701 = vmatpush.bf16.msra.mxu0 %v3672
    %3702 = vmatpush.bf16.msra.mxu0 %v3671
    %3703 = vmatpush.bf16.msra.mxu0 %v3670
    %3704 = vmatpush.bf16.msra.mxu0 %v3669
    %3705 = vmatpush.bf16.msra.mxu0 %v3668
    %3706 = vmatpush.bf16.msra.mxu0 %v3667
    %3707 = vmatmul.bf16.gmra.mxu0 %v3565
    %v3708 = vpop.f32.mrf.mxu0
    %v3709 = vadd.f32 %v3601, %v3708
    %v3710 = vpop.f32.mrf.mxu0
    %3711 = vdwg.mxu0
    %3712 = vmatpush.bf16.msra.mxu0 %v3682
    %3713 = vmatpush.bf16.msra.mxu0 %v3681
    %3714 = vmatpush.bf16.msra.mxu0 %v3680
    %3715 = vmatpush.bf16.msra.mxu0 %v3679
    %3716 = vmatpush.bf16.msra.mxu0 %v3678
    %3717 = vmatpush.bf16.msra.mxu0 %v3677
    %3718 = vmatpush.bf16.msra.mxu0 %v3676
    %3719 = vmatpush.bf16.msra.mxu0 %v3675
    %3720 = vmatmul.bf16.gmra.mxu0 %v3566
    %v3721 = vpop.f32.mrf.mxu0
    %v3722 = vadd.f32 %v3709, %v3721
    %v3723 = vpop.f32.mrf.mxu0
    %3724 = vdwg.mxu0
    %3725 = vst [vmem:[#allocation14] sm:$0xff] %v3722
    // Predicated region
    $region54: #{gru_module_forward.1} parent=1 // pred_check
      _
    $region55: #{gru_module_forward.1} parent=1 // pred_check_branch
      %3727 = sbr.rel (0) target = $region57
    $region56: #{gru_module_forward.1} parent=1 // pred_region
      %3729 = vsyncadd [#allocation5], 0
      %s3731 = sshll.u32 [#allocation14], 4
      %s3732 = int_to_ptr.vmem [resolvable:$true] %s3731
      %s3733 = sshll.u32 %s7, 4
      %s3734 = int_to_ptr.hbm [resolvable:$true] %s3733
      %3736 = dma.vmem_to_hbm [thread:$0]  %s3732, 128, %s3734, [#allocation5]
    $region57: #{gru_module_forward.1} parent=1 // pred_fallthru
      _
    // Predicated region
    $region58: #{gru_module_forward.1} parent=1 // pred_check
      _
    $region59: #{gru_module_forward.1} parent=1 // pred_check_branch
      %3738 = sbr.rel (0) target = $region61
    $region60: #{gru_module_forward.1} parent=1 // pred_region
      %3740 = dma.done [#allocation5], 128
    $region61: #{gru_module_forward.1} parent=1 // pred_fallthru
      _
    %3741 = vsyncpa [#allocation4], 1
    %3742 = vsyncpa [#allocation7], 1
    %3743 = vsyncpa [#allocation10], 1
    %3744 = vsyncpa [#allocation13], 1
    %3745 = vsyncpa [#allocation5], 1

</llo_original>
